<compile_context>
chip_gen: v7x
topology: tpu7x:2x2x1
jax: 0.10.0
libtpu: 0.0.40
codegen_flags: <defaults>
</compile_context>

<pallas_src>
import jax
import jax.numpy as jnp
from jax.experimental import pallas as pl
from jax.experimental.pallas import tpu as pltpu


_VMEM_LIMIT = 32 * 1024 * 1024   # >= default scoped VMEM on v6e/v7x, raises v5e's 16 MiB
_TM_MAX = 512                    # safe for 64 MiB v7x VMEM; good weight reuse on v5e/v6e


# ----------------------------------------------------------------------------
# Pallas kernels
# ----------------------------------------------------------------------------
def _make_tap_conv_kernel(Wp, Mo, mode):
    """Stride-1 3x3 conv over a flattened padded image, fused bias+ReLU.

    x_ref:  (1, Mi, C)   flattened padded activation (Mi >= Mo + 2*Wp + 2)
    w_ref:  (9, C, Co)   BN-scale-folded bf16 tap weights
    b_ref:  (1, Co)      folded BN bias (f32)
    mode == "identity":  r_ref (1, Mo, Co)  bf16 residual, added in epilogue
    mode == "project":   r_ref (1, Mo, Cr)  bf16 residual source,
                         rw_ref (Cr, Co)    scale-folded 1x1 shortcut weight,
                         folded into the accumulation (initializes acc)
    o_ref:  (1, Mo, Co)  Mo = Ho*Wp flattened rows (2 garbage cols per row)
    """

    def taps(x_ref, w_ref):
        acc = None
        for t in range(9):                       # static unrolled tap loop
            kh, kw = divmod(t, 3)
            xt = x_ref[0, pl.ds(kh * Wp + kw, Mo), :]     # static shifted view
            d = jnp.dot(xt, w_ref[t], preferred_element_type=jnp.float32)
            acc = d if acc is None else acc + d
        return acc

    if mode == "none":
        def kernel(x_ref, w_ref, b_ref, o_ref):
            out = taps(x_ref, w_ref) + b_ref[...]
            o_ref[0] = jnp.maximum(out, 0.0).astype(o_ref.dtype)
    elif mode == "identity":
        def kernel(x_ref, w_ref, b_ref, r_ref, o_ref):
            out = taps(x_ref, w_ref) + b_ref[...] + r_ref[0].astype(jnp.float32)
            o_ref[0] = jnp.maximum(out, 0.0).astype(o_ref.dtype)
    elif mode == "project":
        def kernel(x_ref, w_ref, b_ref, r_ref, rw_ref, o_ref):
            acc = jnp.dot(r_ref[0], rw_ref[...],
                          preferred_element_type=jnp.float32)
            out = acc + taps(x_ref, w_ref) + b_ref[...]
            o_ref[0] = jnp.maximum(out, 0.0).astype(o_ref.dtype)
    else:
        raise ValueError(mode)
    return kernel


def _gemm_bias_relu_kernel(p_ref, w_ref, b_ref, o_ref):
    """o = relu(p @ w + b); single full-K block (w already BN-scale-folded)."""
    acc = jnp.dot(p_ref[...], w_ref[...], preferred_element_type=jnp.float32)
    o_ref[...] = jnp.maximum(acc + b_ref[...], 0.0).astype(o_ref.dtype)


# ----------------------------------------------------------------------------
# pallas_call wrappers
# ----------------------------------------------------------------------------
def tap_conv(x_flat, w_taps, bias, *, Wp, Mo, mode="none",
             residual=None, res_w=None, out_dtype=jnp.bfloat16):
    """Stride-1 3x3 conv (+BN folded, +optional residual/projection, +ReLU)."""
    N, Mi, C = x_flat.shape
    Co = w_taps.shape[-1]
    assert Mi >= Mo + 2 * Wp + 2, (Mi, Mo, Wp)

    args = [x_flat, w_taps, bias]
    in_specs = [
        pl.BlockSpec((1, Mi, C), lambda n: (n, 0, 0)),
        pl.BlockSpec((9, C, Co), lambda n: (0, 0, 0)),
        pl.BlockSpec((1, Co), lambda n: (0, 0)),
    ]
    flops = 2 * N * Mo * 9 * C * Co
    nbytes = (x_flat.size * x_flat.dtype.itemsize
              + w_taps.size * w_taps.dtype.itemsize + bias.size * 4
              + N * Mo * Co * jnp.dtype(out_dtype).itemsize)
    if mode != "none":
        args.append(residual)
        in_specs.append(pl.BlockSpec((1, Mo, residual.shape[-1]),
                                     lambda n: (n, 0, 0)))
        nbytes += residual.size * residual.dtype.itemsize
    if mode == "project":
        args.append(res_w)
        in_specs.append(pl.BlockSpec(res_w.shape, lambda n: (0, 0)))
        flops += 2 * N * Mo * res_w.shape[0] * Co
        nbytes += res_w.size * res_w.dtype.itemsize

    return pl.pallas_call(
        _make_tap_conv_kernel(Wp, Mo, mode),
        out_shape=jax.ShapeDtypeStruct((N, Mo, Co), out_dtype),
        grid_spec=pltpu.PrefetchScalarGridSpec(
            num_scalar_prefetch=0,
            grid=(N,),
            in_specs=in_specs,
            out_specs=pl.BlockSpec((1, Mo, Co), lambda n: (n, 0, 0))),
        compiler_params=pltpu.CompilerParams(
            dimension_semantics=("parallel",),
            vmem_limit_bytes=_VMEM_LIMIT),
        cost_estimate=pl.CostEstimate(flops=int(flops), transcendentals=0,
                                      bytes_accessed=int(nbytes)),
    )(*args)


def gemm_bias_relu(p, w, b, out_dtype=jnp.bfloat16):
    """relu(p @ w + b) for the stride-2 conv1 im2col path.

    Single full-K, full-Co block (no K/Co padding, patches streamed once);
    tm = min(M, 512) with a cdiv grid (partial edge blocks are safe because
    rows are independent and only in-bounds rows are written back).
    """
    M, K = p.shape
    Co = w.shape[1]
    tm = M if M <= _TM_MAX else _TM_MAX
    grid = (pl.cdiv(M, tm),)
    cost = pl.CostEstimate(
        flops=2 * M * K * Co, transcendentals=0,
        bytes_accessed=int(p.size * p.dtype.itemsize + w.size * w.dtype.itemsize
                           + b.size * 4 + M * Co * jnp.dtype(out_dtype).itemsize))
    return pl.pallas_call(
        _gemm_bias_relu_kernel,
        out_shape=jax.ShapeDtypeStruct((M, Co), out_dtype),
        grid_spec=pltpu.PrefetchScalarGridSpec(
            num_scalar_prefetch=0,
            grid=grid,
            in_specs=[
                pl.BlockSpec((tm, K), lambda i: (i, 0)),
                pl.BlockSpec((K, Co), lambda i: (0, 0)),
                pl.BlockSpec((1, Co), lambda i: (0, 0)),
            ],
            out_specs=pl.BlockSpec((tm, Co), lambda i: (i, 0))),
        compiler_params=pltpu.CompilerParams(
            dimension_semantics=("parallel",),
            vmem_limit_bytes=_VMEM_LIMIT),
        cost_estimate=cost,
    )(p, w, b)


# ----------------------------------------------------------------------------
# Plain-JAX glue: im2col (stride-2 conv1 only), BN folding, parameter init
# ----------------------------------------------------------------------------
def im2col(x_nhwc, k, stride, pad):
    """x: (N,H,W,C) -> patches (N*Ho*Wo, k*k*C), row order = (kh, kw, c)."""
    N, H, W, C = x_nhwc.shape
    xp = jnp.pad(x_nhwc, ((0, 0), (pad, pad), (pad, pad), (0, 0)))
    Ho = (H + 2 * pad - k) // stride + 1
    Wo = (W + 2 * pad - k) // stride + 1
    cols = []
    for kh in range(k):
        for kw in range(k):
            cols.append(xp[:, kh:kh + Ho * stride:stride,
                           kw:kw + Wo * stride:stride, :])
    patches = jnp.stack(cols, axis=3)            # (N, Ho, Wo, k*k, C)
    return patches.reshape(N * Ho * Wo, k * k * C), Ho, Wo


def fold_bn(gamma, beta, mean, var, eps=1e-5):
    scale = gamma / jnp.sqrt(var + eps)
    bias = beta - mean * scale
    return scale.reshape(1, -1), bias.reshape(1, -1)


def init_bn_params(key, c):
    k1, k2, k3, k4 = jax.random.split(key, 4)
    gamma = jax.random.uniform(k1, (c,), jnp.float32, 0.5, 1.5)
    beta = jax.random.normal(k2, (c,), jnp.float32) * 0.1
    mean = jax.random.normal(k3, (c,), jnp.float32) * 0.1
    var = jax.random.uniform(k4, (c,), jnp.float32, 0.5, 1.5)
    return gamma, beta, mean, var


class BasicBlockPallas:
    """JAX/Pallas equivalent of the PyTorch BasicBlock (inference semantics)."""

    def __init__(self, in_channels, out_channels, stride=1,
                 width_scaling_factor=1.0, key=None):
        if key is None:
            key = jax.random.PRNGKey(0)
        scaled = max(8, int(out_channels * width_scaling_factor))
        self.cin, self.cout, self.stride = in_channels, scaled, stride
        ks = jax.random.split(key, 6)

        # conv weights stored HWIO: (kh, kw, Cin, Cout)
        self.w1 = jax.random.normal(ks[0], (3, 3, in_channels, scaled),
                                    jnp.float32) * 0.1
        self.w2 = jax.random.normal(ks[1], (3, 3, scaled, scaled),
                                    jnp.float32) * 0.1
        self.bn1 = init_bn_params(ks[2], scaled)
        self.bn2 = init_bn_params(ks[3], scaled)

        self.has_projection = (stride != 1) or (in_channels != scaled)
        if self.has_projection:
            self.wsc = jax.random.normal(ks[4], (in_channels, scaled),
                                         jnp.float32) * 0.1
            self.bnsc = init_bn_params(ks[5], scaled)
        else:
            self.wsc = None
            self.bnsc = None

    def __call__(self, x_nchw):
        x = jnp.transpose(x_nchw, (0, 2, 3, 1)).astype(jnp.float32)  # NCHW->NHWC
        N, H, W, cin = x.shape
        cout, stride = self.cout, self.stride

        # Fold BN scales into bf16 weights; biases stay f32.
        s1, b1 = fold_bn(*self.bn1)
        s2, b2 = fold_bn(*self.bn2)
        w1f = (self.w1 * s1).astype(jnp.bfloat16)
        w2f = (self.w2 * s2).astype(jnp.bfloat16)

        # --- conv1 + bn1 + relu ---
        if stride == 1:
            Ho, Wo = H, W
            Wp1 = W + 2
            # pad: 1 top, 2 bottom (1 conv pad + 1 halo row), 1 left, 1 right
            xp = jnp.pad(x.astype(jnp.bfloat16),
                         ((0, 0), (1, 2), (1, 1), (0, 0)))
            out1_flat = tap_conv(xp.reshape(N, (H + 3) * Wp1, cin),
                                 w1f.reshape(9, cin, cout), b1,
                                 Wp=Wp1, Mo=H * Wp1, mode="none",
                                 out_dtype=jnp.bfloat16)
            out1 = out1_flat.reshape(N, H, Wp1, cout)[:, :, :W, :]
        else:
            # TODO(synk): stride-2 conv1 still materializes an im2col patch
            # matrix (~2.25x input); replace with phase-decomposed tap kernel.
            p1, Ho, Wo = im2col(x.astype(jnp.bfloat16), 3, stride, 1)
            out1 = gemm_bias_relu(p1, w1f.reshape(9 * cin, cout), b1,
                                  out_dtype=jnp.bfloat16)
            out1 = out1.reshape(N, Ho, Wo, cout)

        # --- conv2 + bn2 + shortcut + add + relu (single fused kernel) ---
        Wp2 = Wo + 2
        Mo2 = Ho * Wp2
        o1p = jnp.pad(out1, ((0, 0), (1, 2), (1, 1), (0, 0)))   # bf16
        x2 = o1p.reshape(N, (Ho + 3) * Wp2, cout)

        xs = x[:, ::stride, ::stride, :]                          # (N,Ho,Wo,cin)
        xs = jnp.pad(xs, ((0, 0), (0, 0), (0, 2), (0, 0)))       # width -> Wp2
        xs = xs.reshape(N, Mo2, cin).astype(jnp.bfloat16)

        if self.has_projection:
            ssc, bsc = fold_bn(*self.bnsc)
            wscf = (self.wsc * ssc).astype(jnp.bfloat16)
            out_flat = tap_conv(x2, w2f.reshape(9, cout, cout), b2 + bsc,
                                Wp=Wp2, Mo=Mo2, mode="project",
                                residual=xs, res_w=wscf,
                                out_dtype=jnp.float32)
        else:
            out_flat = tap_conv(x2, w2f.reshape(9, cout, cout), b2,
                                Wp=Wp2, Mo=Mo2, mode="identity",
                                residual=xs, out_dtype=jnp.float32)

        out = out_flat.reshape(N, Ho, Wp2, cout)[:, :, :Wo, :]
        return jnp.transpose(out, (0, 3, 1, 2))                  # NHWC -> NCHW


# ----------------------------------------------------------------------------
# Pure-JAX reference with the same precision model (bf16 scale-folded weights,
# bf16 intermediate / residual, f32 accumulation) so a tight tolerance holds.
# ----------------------------------------------------------------------------
def _ref_forward(block, x_nchw):
    x = jnp.transpose(x_nchw, (0, 2, 3, 1)).astype(jnp.float32)

    def conv(inp, w_hwio, stride, pad):
        return jax.lax.conv_general_dilated(
            inp.astype(jnp.bfloat16), w_hwio.astype(jnp.bfloat16),
            (stride, stride), [(pad, pad), (pad, pad)],
            dimension_numbers=('NHWC', 'HWIO', 'NHWC'),
            preferred_element_type=jnp.float32)

    s1, b1 = fold_bn(*block.bn1)
    s2, b2 = fold_bn(*block.bn2)
    w1f = (block.w1 * s1).astype(jnp.bfloat16)
    w2f = (block.w2 * s2).astype(jnp.bfloat16)

    out1 = jax.nn.relu(conv(x, w1f, block.stride, 1) + b1)
    out1 = out1.astype(jnp.bfloat16).astype(jnp.float32)   # bf16 intermediate
    out = conv(out1, w2f, 1, 1) + b2
    if block.has_projection:
        ssc, bsc = fold_bn(*block.bnsc)
        wscf = (block.wsc * ssc).astype(jnp.bfloat16)
        sc = conv(x, wscf.reshape(1, 1, block.cin, block.cout),
                  block.stride, 0) + bsc
    else:
        sc = x.astype(jnp.bfloat16).astype(jnp.float32)     # bf16 residual
    out = jax.nn.relu(out + sc)
    return jnp.transpose(out, (0, 3, 1, 2))


if __name__ == "__main__":
    key = jax.random.PRNGKey(0)
    kx1, kx2, kp1, kp2 = jax.random.split(key, 4)

    # Case 1: projection shortcut path (stride=2, channel change 4 -> 8).
    x1 = jax.random.normal(kx1, (2, 4, 16, 16), jnp.float32)
    blk1 = BasicBlockPallas(in_channels=4, out_channels=8, stride=2,
                            width_scaling_factor=1.0, key=kp1)
    out1 = jax.block_until_ready(jax.jit(blk1.__call__)(x1))
    assert out1.shape == (2, 8, 8, 8), out1.shape
    ref1 = _ref_forward(blk1, x1)
    assert jnp.allclose(out1, ref1, atol=1e-2, rtol=1e-2), \
        f"projection path mismatch: max abs err {jnp.max(jnp.abs(out1 - ref1))}"

    # Case 2: identity shortcut path (stride=1, 8 -> 8 channels).
    x2 = jax.random.normal(kx2, (2, 8, 16, 16), jnp.float32)
    blk2 = BasicBlockPallas(in_channels=8, out_channels=8, stride=1,
                            width_scaling_factor=1.0, key=kp2)
    out2 = jax.block_until_ready(jax.jit(blk2.__call__)(x2))
    assert out2.shape == (2, 8, 16, 16), out2.shape
    ref2 = _ref_forward(blk2, x2)
    assert jnp.allclose(out2, ref2, atol=1e-2, rtol=1e-2), \
        f"identity path mismatch: max abs err {jnp.max(jnp.abs(out2 - ref2))}"

    print("KERNEL_OK")
</pallas_src>

<mosaic_0001>
module attributes {stable_mosaic.version = 11 : i64} {
  func.func @_gemm_bias_relu_kernel(%arg0: i32, %arg1: memref<128x36xbf16, #tpu.memory_space<vmem>>, %arg2: memref<36x8xbf16, #tpu.memory_space<vmem>>, %arg3: memref<1x8xf32, #tpu.memory_space<vmem>>, %arg4: memref<128x8xbf16, #tpu.memory_space<vmem>>) attributes {dimension_semantics = [#tpu.dimension_semantics<parallel>], iteration_bounds = array<i64: 1>, scalar_prefetch = 0 : i64, scratch_operands = 0 : i64, tpu.core_type = #tpu.core_type<tc>, window_params = [{transform_indices = @transform_0, window_bounds = array<i64: 128, 36>}, {pipeline_mode = #tpu.pipeline_mode<synchronous>, transform_indices = @transform_1, window_bounds = array<i64: 36, 8>}, {pipeline_mode = #tpu.pipeline_mode<synchronous>, transform_indices = @transform_2, window_bounds = array<i64: 1, 8>}, {transform_indices = @transform_3, window_bounds = array<i64: 128, 8>}]} {
    %c0 = arith.constant 0 : index
    %c0_0 = arith.constant 0 : index
    %0 = vector.load %arg1[%c0, %c0_0] : memref<128x36xbf16, #tpu.memory_space<vmem>>, vector<128x36xbf16>
    %c0_1 = arith.constant 0 : index
    %c0_2 = arith.constant 0 : index
    %1 = vector.load %arg2[%c0_1, %c0_2] : memref<36x8xbf16, #tpu.memory_space<vmem>>, vector<36x8xbf16>
    %cst = arith.constant dense<0.000000e+00> : vector<128x8xf32>
    %2 = tpu.matmul %0, %1, %cst {dimension_numbers = #tpu.dot_dimension_numbers<[1], [0], [0], [1], [0, 0, 1, 1], [], []>} : vector<128x36xbf16>, vector<36x8xbf16>, vector<128x8xf32> -> vector<128x8xf32>
    %c0_3 = arith.constant 0 : index
    %c0_4 = arith.constant 0 : index
    %3 = vector.load %arg3[%c0_3, %c0_4] : memref<1x8xf32, #tpu.memory_space<vmem>>, vector<1x8xf32>
    %4 = vector.broadcast %3 : vector<1x8xf32> to vector<128x8xf32>
    %5 = arith.addf %2, %4 : vector<128x8xf32>
    %cst_5 = arith.constant 0.000000e+00 : f32
    %6 = vector.broadcast %cst_5 : f32 to vector<128x8xf32>
    %7 = arith.maximumf %5, %6 : vector<128x8xf32>
    %8 = arith.truncf %7 : vector<128x8xf32> to vector<128x8xbf16>
    %c0_6 = arith.constant 0 : index
    %c0_7 = arith.constant 0 : index
    %9 = vector.load %arg4[%c0_6, %c0_7] : memref<128x8xbf16, #tpu.memory_space<vmem>>, vector<128x8xbf16>
    tpu.vector_store %arg4[%c0_6, %c0_7], %8 {strides = array<i32>} : memref<128x8xbf16, #tpu.memory_space<vmem>>, vector<128x8xbf16>,
    return
  }
  func.func @transform_0(%arg0: i32) -> (i32, i32) {
    %c0_i32 = arith.constant 0 : i32
    %c0_i32_0 = arith.constant 0 : i32
    return %arg0, %c0_i32 : i32, i32
  }
  func.func @transform_1(%arg0: i32) -> (i32, i32) {
    %c0_i32 = arith.constant 0 : i32
    %c0_i32_0 = arith.constant 0 : i32
    %c0_i32_1 = arith.constant 0 : i32
    return %c0_i32, %c0_i32_0 : i32, i32
  }
  func.func @transform_2(%arg0: i32) -> (i32, i32) {
    %c0_i32 = arith.constant 0 : i32
    %c0_i32_0 = arith.constant 0 : i32
    %c0_i32_1 = arith.constant 0 : i32
    return %c0_i32, %c0_i32_0 : i32, i32
  }
  func.func @transform_3(%arg0: i32) -> (i32, i32) {
    %c0_i32 = arith.constant 0 : i32
    %c0_i32_0 = arith.constant 0 : i32
    return %arg0, %c0_i32 : i32, i32
  }
}

module attributes {stable_mosaic.version = 11 : i64} {
  func.func @kernel(%arg0: i32, %arg1: memref<1x110x8xbf16, #tpu.memory_space<vmem>>, %arg2: memref<9x8x8xbf16, #tpu.memory_space<vmem>>, %arg3: memref<1x8xf32, #tpu.memory_space<vmem>>, %arg4: memref<1x80x4xbf16, #tpu.memory_space<vmem>>, %arg5: memref<4x8xbf16, #tpu.memory_space<vmem>>, %arg6: memref<1x80x8xf32, #tpu.memory_space<vmem>>) attributes {dimension_semantics = [#tpu.dimension_semantics<parallel>], iteration_bounds = array<i64: 2>, scalar_prefetch = 0 : i64, scratch_operands = 0 : i64, tpu.core_type = #tpu.core_type<tc>, window_params = [{transform_indices = @transform_0, window_bounds = array<i64: 1, 110, 8>}, {pipeline_mode = #tpu.pipeline_mode<synchronous>, transform_indices = @transform_1, window_bounds = array<i64: 9, 8, 8>}, {pipeline_mode = #tpu.pipeline_mode<synchronous>, transform_indices = @transform_2, window_bounds = array<i64: 1, 8>}, {transform_indices = @transform_3, window_bounds = array<i64: 1, 80, 4>}, {pipeline_mode = #tpu.pipeline_mode<synchronous>, transform_indices = @transform_4, window_bounds = array<i64: 4, 8>}, {transform_indices = @transform_5, window_bounds = array<i64: 1, 80, 8>}]} {
    %c0 = arith.constant 0 : index
    %c0_0 = arith.constant 0 : index
    %c0_1 = arith.constant 0 : index
    %0 = vector.load %arg4[%c0, %c0_0, %c0_1] : memref<1x80x4xbf16, #tpu.memory_space<vmem>>, vector<1x80x4xbf16>
    %1 = vector.shape_cast %0 : vector<1x80x4xbf16> to vector<80x4xbf16>
    %c0_2 = arith.constant 0 : index
    %c0_3 = arith.constant 0 : index
    %2 = vector.load %arg5[%c0_2, %c0_3] : memref<4x8xbf16, #tpu.memory_space<vmem>>, vector<4x8xbf16>
    %cst = arith.constant dense<0.000000e+00> : vector<80x8xf32>
    %3 = tpu.matmul %1, %2, %cst {dimension_numbers = #tpu.dot_dimension_numbers<[1], [0], [0], [1], [0, 0, 1, 1], [], []>} : vector<80x4xbf16>, vector<4x8xbf16>, vector<80x8xf32> -> vector<80x8xf32>
    %c0_4 = arith.constant 0 : index
    %c0_5 = arith.constant 0 : index
    %c0_6 = arith.constant 0 : index
    %4 = vector.load %arg1[%c0_4, %c0_5, %c0_6] : memref<1x110x8xbf16, #tpu.memory_space<vmem>>, vector<1x80x8xbf16>
    %5 = vector.shape_cast %4 : vector<1x80x8xbf16> to vector<80x8xbf16>
    %c0_7 = arith.constant 0 : index
    %c0_8 = arith.constant 0 : index
    %c0_9 = arith.constant 0 : index
    %6 = vector.load %arg2[%c0_7, %c0_8, %c0_9] : memref<9x8x8xbf16, #tpu.memory_space<vmem>>, vector<1x8x8xbf16>
    %7 = vector.shape_cast %6 : vector<1x8x8xbf16> to vector<8x8xbf16>
    %cst_10 = arith.constant dense<0.000000e+00> : vector<80x8xf32>
    %8 = tpu.matmul %5, %7, %cst_10 {dimension_numbers = #tpu.dot_dimension_numbers<[1], [0], [0], [1], [0, 0, 1, 1], [], []>} : vector<80x8xbf16>, vector<8x8xbf16>, vector<80x8xf32> -> vector<80x8xf32>
    %c0_11 = arith.constant 0 : index
    %c1 = arith.constant 1 : index
    %c0_12 = arith.constant 0 : index
    %9 = vector.load %arg1[%c0_11, %c1, %c0_12] : memref<1x110x8xbf16, #tpu.memory_space<vmem>>, vector<1x80x8xbf16>
    %10 = vector.shape_cast %9 : vector<1x80x8xbf16> to vector<80x8xbf16>
    %c1_13 = arith.constant 1 : index
    %c0_14 = arith.constant 0 : index
    %c0_15 = arith.constant 0 : index
    %11 = vector.load %arg2[%c1_13, %c0_14, %c0_15] : memref<9x8x8xbf16, #tpu.memory_space<vmem>>, vector<1x8x8xbf16>
    %12 = vector.shape_cast %11 : vector<1x8x8xbf16> to vector<8x8xbf16>
    %cst_16 = arith.constant dense<0.000000e+00> : vector<80x8xf32>
    %13 = tpu.matmul %10, %12, %cst_16 {dimension_numbers = #tpu.dot_dimension_numbers<[1], [0], [0], [1], [0, 0, 1, 1], [], []>} : vector<80x8xbf16>, vector<8x8xbf16>, vector<80x8xf32> -> vector<80x8xf32>
    %14 = arith.addf %8, %13 : vector<80x8xf32>
    %c0_17 = arith.constant 0 : index
    %c2 = arith.constant 2 : index
    %c0_18 = arith.constant 0 : index
    %15 = vector.load %arg1[%c0_17, %c2, %c0_18] : memref<1x110x8xbf16, #tpu.memory_space<vmem>>, vector<1x80x8xbf16>
    %16 = vector.shape_cast %15 : vector<1x80x8xbf16> to vector<80x8xbf16>
    %c2_19 = arith.constant 2 : index
    %c0_20 = arith.constant 0 : index
    %c0_21 = arith.constant 0 : index
    %17 = vector.load %arg2[%c2_19, %c0_20, %c0_21] : memref<9x8x8xbf16, #tpu.memory_space<vmem>>, vector<1x8x8xbf16>
    %18 = vector.shape_cast %17 : vector<1x8x8xbf16> to vector<8x8xbf16>
    %cst_22 = arith.constant dense<0.000000e+00> : vector<80x8xf32>
    %19 = tpu.matmul %16, %18, %cst_22 {dimension_numbers = #tpu.dot_dimension_numbers<[1], [0], [0], [1], [0, 0, 1, 1], [], []>} : vector<80x8xbf16>, vector<8x8xbf16>, vector<80x8xf32> -> vector<80x8xf32>
    %20 = arith.addf %14, %19 : vector<80x8xf32>
    %c0_23 = arith.constant 0 : index
    %c10 = arith.constant 10 : index
    %c0_24 = arith.constant 0 : index
    %21 = vector.load %arg1[%c0_23, %c10, %c0_24] : memref<1x110x8xbf16, #tpu.memory_space<vmem>>, vector<1x80x8xbf16>
    %22 = vector.shape_cast %21 : vector<1x80x8xbf16> to vector<80x8xbf16>
    %c3 = arith.constant 3 : index
    %c0_25 = arith.constant 0 : index
    %c0_26 = arith.constant 0 : index
    %23 = vector.load %arg2[%c3, %c0_25, %c0_26] : memref<9x8x8xbf16, #tpu.memory_space<vmem>>, vector<1x8x8xbf16>
    %24 = vector.shape_cast %23 : vector<1x8x8xbf16> to vector<8x8xbf16>
    %cst_27 = arith.constant dense<0.000000e+00> : vector<80x8xf32>
    %25 = tpu.matmul %22, %24, %cst_27 {dimension_numbers = #tpu.dot_dimension_numbers<[1], [0], [0], [1], [0, 0, 1, 1], [], []>} : vector<80x8xbf16>, vector<8x8xbf16>, vector<80x8xf32> -> vector<80x8xf32>
    %26 = arith.addf %20, %25 : vector<80x8xf32>
    %c0_28 = arith.constant 0 : index
    %c11 = arith.constant 11 : index
    %c0_29 = arith.constant 0 : index
    %27 = vector.load %arg1[%c0_28, %c11, %c0_29] : memref<1x110x8xbf16, #tpu.memory_space<vmem>>, vector<1x80x8xbf16>
    %28 = vector.shape_cast %27 : vector<1x80x8xbf16> to vector<80x8xbf16>
    %c4 = arith.constant 4 : index
    %c0_30 = arith.constant 0 : index
    %c0_31 = arith.constant 0 : index
    %29 = vector.load %arg2[%c4, %c0_30, %c0_31] : memref<9x8x8xbf16, #tpu.memory_space<vmem>>, vector<1x8x8xbf16>
    %30 = vector.shape_cast %29 : vector<1x8x8xbf16> to vector<8x8xbf16>
    %cst_32 = arith.constant dense<0.000000e+00> : vector<80x8xf32>
    %31 = tpu.matmul %28, %30, %cst_32 {dimension_numbers = #tpu.dot_dimension_numbers<[1], [0], [0], [1], [0, 0, 1, 1], [], []>} : vector<80x8xbf16>, vector<8x8xbf16>, vector<80x8xf32> -> vector<80x8xf32>
    %32 = arith.addf %26, %31 : vector<80x8xf32>
    %c0_33 = arith.constant 0 : index
    %c12 = arith.constant 12 : index
    %c0_34 = arith.constant 0 : index
    %33 = vector.load %arg1[%c0_33, %c12, %c0_34] : memref<1x110x8xbf16, #tpu.memory_space<vmem>>, vector<1x80x8xbf16>
    %34 = vector.shape_cast %33 : vector<1x80x8xbf16> to vector<80x8xbf16>
    %c5 = arith.constant 5 : index
    %c0_35 = arith.constant 0 : index
    %c0_36 = arith.constant 0 : index
    %35 = vector.load %arg2[%c5, %c0_35, %c0_36] : memref<9x8x8xbf16, #tpu.memory_space<vmem>>, vector<1x8x8xbf16>
    %36 = vector.shape_cast %35 : vector<1x8x8xbf16> to vector<8x8xbf16>
    %cst_37 = arith.constant dense<0.000000e+00> : vector<80x8xf32>
    %37 = tpu.matmul %34, %36, %cst_37 {dimension_numbers = #tpu.dot_dimension_numbers<[1], [0], [0], [1], [0, 0, 1, 1], [], []>} : vector<80x8xbf16>, vector<8x8xbf16>, vector<80x8xf32> -> vector<80x8xf32>
    %38 = arith.addf %32, %37 : vector<80x8xf32>
    %c0_38 = arith.constant 0 : index
    %c20 = arith.constant 20 : index
    %c0_39 = arith.constant 0 : index
    %39 = vector.load %arg1[%c0_38, %c20, %c0_39] : memref<1x110x8xbf16, #tpu.memory_space<vmem>>, vector<1x80x8xbf16>
    %40 = vector.shape_cast %39 : vector<1x80x8xbf16> to vector<80x8xbf16>
    %c6 = arith.constant 6 : index
    %c0_40 = arith.constant 0 : index
    %c0_41 = arith.constant 0 : index
    %41 = vector.load %arg2[%c6, %c0_40, %c0_41] : memref<9x8x8xbf16, #tpu.memory_space<vmem>>, vector<1x8x8xbf16>
    %42 = vector.shape_cast %41 : vector<1x8x8xbf16> to vector<8x8xbf16>
    %cst_42 = arith.constant dense<0.000000e+00> : vector<80x8xf32>
    %43 = tpu.matmul %40, %42, %cst_42 {dimension_numbers = #tpu.dot_dimension_numbers<[1], [0], [0], [1], [0, 0, 1, 1], [], []>} : vector<80x8xbf16>, vector<8x8xbf16>, vector<80x8xf32> -> vector<80x8xf32>
    %44 = arith.addf %38, %43 : vector<80x8xf32>
    %c0_43 = arith.constant 0 : index
    %c21 = arith.constant 21 : index
    %c0_44 = arith.constant 0 : index
    %45 = vector.load %arg1[%c0_43, %c21, %c0_44] : memref<1x110x8xbf16, #tpu.memory_space<vmem>>, vector<1x80x8xbf16>
    %46 = vector.shape_cast %45 : vector<1x80x8xbf16> to vector<80x8xbf16>
    %c7 = arith.constant 7 : index
    %c0_45 = arith.constant 0 : index
    %c0_46 = arith.constant 0 : index
    %47 = vector.load %arg2[%c7, %c0_45, %c0_46] : memref<9x8x8xbf16, #tpu.memory_space<vmem>>, vector<1x8x8xbf16>
    %48 = vector.shape_cast %47 : vector<1x8x8xbf16> to vector<8x8xbf16>
    %cst_47 = arith.constant dense<0.000000e+00> : vector<80x8xf32>
    %49 = tpu.matmul %46, %48, %cst_47 {dimension_numbers = #tpu.dot_dimension_numbers<[1], [0], [0], [1], [0, 0, 1, 1], [], []>} : vector<80x8xbf16>, vector<8x8xbf16>, vector<80x8xf32> -> vector<80x8xf32>
    %50 = arith.addf %44, %49 : vector<80x8xf32>
    %c0_48 = arith.constant 0 : index
    %c22 = arith.constant 22 : index
    %c0_49 = arith.constant 0 : index
    %51 = vector.load %arg1[%c0_48, %c22, %c0_49] : memref<1x110x8xbf16, #tpu.memory_space<vmem>>, vector<1x80x8xbf16>
    %52 = vector.shape_cast %51 : vector<1x80x8xbf16> to vector<80x8xbf16>
    %c8 = arith.constant 8 : index
    %c0_50 = arith.constant 0 : index
    %c0_51 = arith.constant 0 : index
    %53 = vector.load %arg2[%c8, %c0_50, %c0_51] : memref<9x8x8xbf16, #tpu.memory_space<vmem>>, vector<1x8x8xbf16>
    %54 = vector.shape_cast %53 : vector<1x8x8xbf16> to vector<8x8xbf16>
    %cst_52 = arith.constant dense<0.000000e+00> : vector<80x8xf32>
    %55 = tpu.matmul %52, %54, %cst_52 {dimension_numbers = #tpu.dot_dimension_numbers<[1], [0], [0], [1], [0, 0, 1, 1], [], []>} : vector<80x8xbf16>, vector<8x8xbf16>, vector<80x8xf32> -> vector<80x8xf32>
    %56 = arith.addf %50, %55 : vector<80x8xf32>
    %57 = arith.addf %3, %56 : vector<80x8xf32>
    %c0_53 = arith.constant 0 : index
    %c0_54 = arith.constant 0 : index
    %58 = vector.load %arg3[%c0_53, %c0_54] : memref<1x8xf32, #tpu.memory_space<vmem>>, vector<1x8xf32>
    %59 = vector.broadcast %58 : vector<1x8xf32> to vector<80x8xf32>
    %60 = arith.addf %57, %59 : vector<80x8xf32>
    %cst_55 = arith.constant 0.000000e+00 : f32
    %61 = vector.broadcast %cst_55 : f32 to vector<80x8xf32>
    %62 = arith.maximumf %60, %61 : vector<80x8xf32>
    %c0_56 = arith.constant 0 : index
    %c0_57 = arith.constant 0 : index
    %c0_58 = arith.constant 0 : index
    %63 = vector.load %arg6[%c0_56, %c0_57, %c0_58] : memref<1x80x8xf32, #tpu.memory_space<vmem>>, vector<1x80x8xf32>
    %64 = vector.shape_cast %63 : vector<1x80x8xf32> to vector<80x8xf32>
    %65 = vector.shape_cast %62 : vector<80x8xf32> to vector<1x80x8xf32>
    tpu.vector_store %arg6[%c0_56, %c0_57, %c0_58], %65 {strides = array<i32>} : memref<1x80x8xf32, #tpu.memory_space<vmem>>, vector<1x80x8xf32>,
    return
  }
  func.func @transform_0(%arg0: i32) -> (i32, i32, i32) {
    %c0_i32 = arith.constant 0 : i32
    %c0_i32_0 = arith.constant 0 : i32
    %c0_i32_1 = arith.constant 0 : i32
    return %arg0, %c0_i32, %c0_i32_0 : i32, i32, i32
  }
  func.func @transform_1(%arg0: i32) -> (i32, i32, i32) {
    %c0_i32 = arith.constant 0 : i32
    %c0_i32_0 = arith.constant 0 : i32
    %c0_i32_1 = arith.constant 0 : i32
    %c0_i32_2 = arith.constant 0 : i32
    return %c0_i32, %c0_i32_0, %c0_i32_1 : i32, i32, i32
  }
  func.func @transform_2(%arg0: i32) -> (i32, i32) {
    %c0_i32 = arith.constant 0 : i32
    %c0_i32_0 = arith.constant 0 : i32
    %c0_i32_1 = arith.constant 0 : i32
    return %c0_i32, %c0_i32_0 : i32, i32
  }
  func.func @transform_3(%arg0: i32) -> (i32, i32, i32) {
    %c0_i32 = arith.constant 0 : i32
    %c0_i32_0 = arith.constant 0 : i32
    %c0_i32_1 = arith.constant 0 : i32
    return %arg0, %c0_i32, %c0_i32_0 : i32, i32, i32
  }
  func.func @transform_4(%arg0: i32) -> (i32, i32) {
    %c0_i32 = arith.constant 0 : i32
    %c0_i32_0 = arith.constant 0 : i32
    %c0_i32_1 = arith.constant 0 : i32
    return %c0_i32, %c0_i32_0 : i32, i32
  }
  func.func @transform_5(%arg0: i32) -> (i32, i32, i32) {
    %c0_i32 = arith.constant 0 : i32
    %c0_i32_0 = arith.constant 0 : i32
    %c0_i32_1 = arith.constant 0 : i32
    return %arg0, %c0_i32, %c0_i32_0 : i32, i32, i32
  }
}

</mosaic_0001>

<llo_original>
// kernel: a_call__.2
$region0: #{a_call__.2}
  #allocation0 [shape = 'u32[]', space=smem, size = 0x4, offset = 0x4, fixed_abs, tag = 'smem constant byte address 0x4 - core index']
  #allocation1 [shape = 'u32[144,128]{1,0:T(1,128)}', space=vmem, size = 0x12000, scoped, tag = 'internal scratch']
  %s0 = inlined_call_operand.vmem [shape: bf16[128,36], index: 0, kind: input, shape index: {}]
  %s1 = inlined_call_operand.vmem [shape: bf16[36,8], index: 1, kind: input, shape index: {}]
  %s2 = inlined_call_operand.vmem [shape: f32[1,8], index: 2, kind: input, shape index: {}]
  %s3 = inlined_call_operand.vmem [shape: bf16[128,8], index: 3, kind: output, shape index: {}]
  %s4 = sld [smem:[#allocation0]]
  $region22: #{a_call__.2} parent=0
    _
  %s6 = ssub.s32 1, %s4
  %s7 = scalar_select 0, %s6, %s4
  // Predicated region
  $region2: #{a_call__.2} parent=0 // pred_check
    _
  $region3: #{a_call__.2} parent=0 // pred_check_branch
    %9 = sbr.rel (0) target = $region5
  $region4: #{a_call__.2} parent=0 // pred_region
    _
  $region5: #{a_call__.2} parent=0 // pred_fallthru
    _
  // Predicated region
  $region6: #{a_call__.2} parent=0 // pred_check
    _
  $region7: #{a_call__.2} parent=0 // pred_check_branch
    %11 = sbr.rel (0) target = $region9
  $region8: #{a_call__.2} parent=0 // pred_region
    _
  $region9: #{a_call__.2} parent=0 // pred_fallthru
    _
  // Predicated region
  $region10: #{a_call__.2} parent=0 // pred_check
    _
  $region11: #{a_call__.2} parent=0 // pred_check_branch
    %13 = sbr.rel (0) target = $region13
  $region12: #{a_call__.2} parent=0 // pred_region
    _
  $region13: #{a_call__.2} parent=0 // pred_fallthru
    _
  %v15 = vld [vmem:[%s0] sm:$0xf]
  %v16 = vld [vmem:[%s0 + $0x4] sm:$0xf]
  %v17 = vld [vmem:[%s0 + $0x8] sm:$0xf]
  %v18 = vld [vmem:[%s0 + $0xc] sm:$0xf]
  %v19 = vld [vmem:[%s0 + $0x10] sm:$0xf]
  %v20 = vld [vmem:[%s0 + $0x14] sm:$0xf]
  %v21 = vld [vmem:[%s0 + $0x18] sm:$0xf]
  %v22 = vld [vmem:[%s0 + $0x1c] sm:$0xf]
  %v23 = vld [vmem:[%s0 + $0x20] sm:$0xf]
  %v24 = vld [vmem:[%s0 + $0x24] sm:$0xf]
  %v25 = vld [vmem:[%s0 + $0x28] sm:$0xf]
  %v26 = vld [vmem:[%s0 + $0x2c] sm:$0xf]
  %v27 = vld [vmem:[%s0 + $0x30] sm:$0xf]
  %v28 = vld [vmem:[%s0 + $0x34] sm:$0xf]
  %v29 = vld [vmem:[%s0 + $0x38] sm:$0xf]
  %v30 = vld [vmem:[%s0 + $0x3c] sm:$0xf]
  %v31 = vld [vmem:[%s1] sm:$0xf]
  %v32 = vld [vmem:[%s1 + $0x4] sm:$0xf]
  %v33 = vld [vmem:[%s1 + $0x8] sm:$0xf]
  %v34 = vld [vmem:[%s1 + $0xc] sm:$0xf]
  %v35 = vld [vmem:[%s1 + $0x10] sm:$0x3]
  %v36 = vld [vmem:[%s2] sm:$0x1]
  %v38 = vlaneseq
  %v39 = vshrl.u32 %v38, 7
  %v40 = vsub.s32 0, %v39
  %v41 = vrot.slane %v36, %v40
  %v59 = vunpack.c.l.b16 %v15
  %v60 = vunpack.c.l.b16 %v16
  %v61 = vunpack.c.l.b16 %v17
  %v62 = vunpack.c.l.b16 %v18
  %v63 = vunpack.c.l.b16 %v19
  %v64 = vunpack.c.l.b16 %v20
  %v65 = vunpack.c.l.b16 %v21
  %v66 = vunpack.c.l.b16 %v22
  %v67 = vunpack.c.l.b16 %v23
  %v68 = vunpack.c.l.b16 %v24
  %v69 = vunpack.c.l.b16 %v25
  %v70 = vunpack.c.l.b16 %v26
  %v71 = vunpack.c.l.b16 %v27
  %v72 = vunpack.c.l.b16 %v28
  %v73 = vunpack.c.l.b16 %v29
  %v74 = vunpack.c.l.b16 %v30
  %v75 = vpack.c.b16 %v60, %v59
  %v76 = vpack.c.b16 %v62, %v61
  %v77 = vpack.c.b16 %v64, %v63
  %v78 = vpack.c.b16 %v66, %v65
  %v79 = vpack.c.b16 %v68, %v67
  %v80 = vpack.c.b16 %v70, %v69
  %v81 = vpack.c.b16 %v72, %v71
  %v82 = vpack.c.b16 %v74, %v73
  %v88 = vunpack.c.l.b16 %v31
  %v89 = vunpack.c.l.b16 %v32
  %v90 = vunpack.c.l.b16 %v33
  %v91 = vunpack.c.l.b16 %v34
  %v92 = vunpack.c.l.b16 %v35
  %v93 = vpack.c.b16 %v89, %v88
  %v94 = vpack.c.b16 %v91, %v90
  %v95 = vpack.c.b16 %v92, %v92
  %vm98 = vcmask 293888
  %v100 = vsel %vm98, %v75, 0
  %v103 = vsel %vm98, %v76, 0
  %v106 = vsel %vm98, %v77, 0
  %v109 = vsel %vm98, %v78, 0
  %v112 = vsel %vm98, %v79, 0
  %v115 = vsel %vm98, %v80, 0
  %v118 = vsel %vm98, %v81, 0
  %v121 = vsel %vm98, %v82, 0
  %vm123 = vcmask 1041408
  %v125 = vsel %vm123, %v95, 0
  %127 = vmatprep.subr.bf16.mxu0 0
  %128 = vmatpush1.bf16.msra.mxu0 %v93
  %129 = vmatprep.subr.bf16.mxu0 0
  %130 = vmatpush1.bf16.msra.mxu0 %v94
  %131 = vmatprep.subr.bf16.mxu0 0
  %132 = vmatpush1.bf16.msra.mxu0 %v125
  %133 = vmatprep.subr.bf16.mxu0 0
  %134 = vmatpush1.bf16.msra.mxu0 0
  %135 = vmatprep.subr.bf16.mxu0 0
  %136 = vmatpush1.bf16.msra.mxu0 0
  %137 = vmatprep.subr.bf16.mxu0 0
  %138 = vmatpush1.bf16.msra.mxu0 0
  %139 = vmatprep.subr.bf16.mxu0 0
  %140 = vmatpush1.bf16.msra.mxu0 0
  %141 = vmatprep.subr.bf16.mxu0 0
  %142 = vmatpush1.bf16.msra.mxu0 0
  %143 = vmatprep.subr.bf16.mxu0 0
  %144 = vmatpush1.bf16.msra.mxu0 0
  %145 = vmatprep.subr.bf16.mxu0 0
  %146 = vmatpush1.bf16.msra.mxu0 0
  %147 = vmatprep.subr.bf16.mxu0 0
  %148 = vmatpush1.bf16.msra.mxu0 0
  %149 = vmatprep.subr.bf16.mxu0 0
  %150 = vmatpush1.bf16.msra.mxu0 0
  %151 = vmatprep.subr.bf16.mxu0 0
  %152 = vmatpush1.bf16.msra.mxu0 0
  %153 = vmatprep.subr.bf16.mxu0 0
  %154 = vmatpush1.bf16.msra.mxu0 0
  %155 = vmatprep.subr.bf16.mxu0 0
  %156 = vmatpush1.bf16.msra.mxu0 0
  %157 = vmatprep.subr.bf16.mxu0 0
  %158 = vmatpush1.bf16.msra.mxu0 0
  %159 = vmatprep.mubr.bf16.mxu0 0
  %160 = vmatmul.mubr.bf16.gmra.mrb[0].mxu0 %v100
  %v161 = vpop.f32.mrb[0].mxu0
  %v162 = vadd.f32 %v41, %v161
  %v163 = vpop.f32.mrb[0].mxu0
  %v164 = vpop.f32.mrb[0].mxu0
  %v165 = vadd.f32 %v41, %v164
  %v166 = vpop.f32.mrb[0].mxu0
  %167 = vmatprep.mubr.bf16.mxu0 0
  %168 = vmatmul.mubr.bf16.gmra.mrb[0].mxu0 %v103
  %v169 = vpop.f32.mrb[0].mxu0
  %v170 = vadd.f32 %v41, %v169
  %v171 = vpop.f32.mrb[0].mxu0
  %v172 = vpop.f32.mrb[0].mxu0
  %v173 = vadd.f32 %v41, %v172
  %v174 = vpop.f32.mrb[0].mxu0
  %175 = vmatprep.mubr.bf16.mxu0 0
  %176 = vmatmul.mubr.bf16.gmra.mrb[0].mxu0 %v106
  %v177 = vpop.f32.mrb[0].mxu0
  %v178 = vadd.f32 %v41, %v177
  %v179 = vpop.f32.mrb[0].mxu0
  %v180 = vpop.f32.mrb[0].mxu0
  %v181 = vadd.f32 %v41, %v180
  %v182 = vpop.f32.mrb[0].mxu0
  %183 = vmatprep.mubr.bf16.mxu0 0
  %184 = vmatmul.mubr.bf16.gmra.mrb[0].mxu0 %v109
  %v185 = vpop.f32.mrb[0].mxu0
  %v186 = vadd.f32 %v41, %v185
  %v187 = vpop.f32.mrb[0].mxu0
  %v188 = vpop.f32.mrb[0].mxu0
  %v189 = vadd.f32 %v41, %v188
  %v190 = vpop.f32.mrb[0].mxu0
  %191 = vmatprep.mubr.bf16.mxu0 0
  %192 = vmatmul.mubr.bf16.gmra.mrb[0].mxu0 %v112
  %v193 = vpop.f32.mrb[0].mxu0
  %v194 = vadd.f32 %v41, %v193
  %v195 = vpop.f32.mrb[0].mxu0
  %v196 = vpop.f32.mrb[0].mxu0
  %v197 = vadd.f32 %v41, %v196
  %v198 = vpop.f32.mrb[0].mxu0
  %199 = vmatprep.mubr.bf16.mxu0 0
  %200 = vmatmul.mubr.bf16.gmra.mrb[0].mxu0 %v115
  %v201 = vpop.f32.mrb[0].mxu0
  %v202 = vadd.f32 %v41, %v201
  %v203 = vpop.f32.mrb[0].mxu0
  %v204 = vpop.f32.mrb[0].mxu0
  %v205 = vadd.f32 %v41, %v204
  %v206 = vpop.f32.mrb[0].mxu0
  %207 = vmatprep.mubr.bf16.mxu0 0
  %208 = vmatmul.mubr.bf16.gmra.mrb[0].mxu0 %v118
  %v209 = vpop.f32.mrb[0].mxu0
  %v210 = vadd.f32 %v41, %v209
  %v211 = vpop.f32.mrb[0].mxu0
  %v212 = vpop.f32.mrb[0].mxu0
  %v213 = vadd.f32 %v41, %v212
  %v214 = vpop.f32.mrb[0].mxu0
  %215 = vmatprep.mubr.bf16.mxu0 0
  %216 = vmatmul.mubr.bf16.gmra.mrb[0].mxu0 %v121
  %v217 = vpop.f32.mrb[0].mxu0
  %v218 = vadd.f32 %v41, %v217
  %v219 = vpop.f32.mrb[0].mxu0
  %v220 = vpop.f32.mrb[0].mxu0
  %v221 = vadd.f32 %v41, %v220
  %v222 = vpop.f32.mrb[0].mxu0
  %223 = vdwg.mxu0
  %v224 = vmax.f32 %v162, 0.0
  %v225 = vmax.f32 %v165, 0.0
  %v226 = vmax.f32 %v170, 0.0
  %v227 = vmax.f32 %v173, 0.0
  %v228 = vmax.f32 %v178, 0.0
  %v229 = vmax.f32 %v181, 0.0
  %v230 = vmax.f32 %v186, 0.0
  %v231 = vmax.f32 %v189, 0.0
  %v232 = vmax.f32 %v194, 0.0
  %v233 = vmax.f32 %v197, 0.0
  %v234 = vmax.f32 %v202, 0.0
  %v235 = vmax.f32 %v205, 0.0
  %v236 = vmax.f32 %v210, 0.0
  %v237 = vmax.f32 %v213, 0.0
  %v238 = vmax.f32 %v218, 0.0
  %v239 = vmax.f32 %v221, 0.0
  %v240 = vpack.c.bf16 %v225, %v224
  %v241 = vpack.c.bf16 %v227, %v226
  %v242 = vpack.c.bf16 %v229, %v228
  %v243 = vpack.c.bf16 %v231, %v230
  %v244 = vpack.c.bf16 %v233, %v232
  %v245 = vpack.c.bf16 %v235, %v234
  %v246 = vpack.c.bf16 %v237, %v236
  %v247 = vpack.c.bf16 %v239, %v238
  %v256 = vunpack.c.l.b16 %v240
  %v257 = vunpack.c.h.b16 %v240
  %v258 = vunpack.c.l.b16 %v241
  %v259 = vunpack.c.h.b16 %v241
  %v260 = vunpack.c.l.b16 %v242
  %v261 = vunpack.c.h.b16 %v242
  %v262 = vunpack.c.l.b16 %v243
  %v263 = vunpack.c.h.b16 %v243
  %v264 = vunpack.c.l.b16 %v244
  %v265 = vunpack.c.h.b16 %v244
  %v266 = vunpack.c.l.b16 %v245
  %v267 = vunpack.c.h.b16 %v245
  %v268 = vunpack.c.l.b16 %v246
  %v269 = vunpack.c.h.b16 %v246
  %v270 = vunpack.c.l.b16 %v247
  %v271 = vunpack.c.h.b16 %v247
  %v272 = vpack.c.b16 %v256, %v256
  %v273 = vpack.c.b16 %v257, %v257
  %v274 = vpack.c.b16 %v258, %v258
  %v275 = vpack.c.b16 %v259, %v259
  %v276 = vpack.c.b16 %v260, %v260
  %v277 = vpack.c.b16 %v261, %v261
  %v278 = vpack.c.b16 %v262, %v262
  %v279 = vpack.c.b16 %v263, %v263
  %v280 = vpack.c.b16 %v264, %v264
  %v281 = vpack.c.b16 %v265, %v265
  %v282 = vpack.c.b16 %v266, %v266
  %v283 = vpack.c.b16 %v267, %v267
  %v284 = vpack.c.b16 %v268, %v268
  %v285 = vpack.c.b16 %v269, %v269
  %v286 = vpack.c.b16 %v270, %v270
  %v287 = vpack.c.b16 %v271, %v271
  %vm304 = vcmask 60416
  %305 = vst.msk [vmem:[%s3] sm:$0xf] %vm304, %v272
  %306 = vst.msk [vmem:[%s3 + $0x4] sm:$0xf] %vm304, %v273
  %307 = vst.msk [vmem:[%s3 + $0x8] sm:$0xf] %vm304, %v274
  %308 = vst.msk [vmem:[%s3 + $0xc] sm:$0xf] %vm304, %v275
  %309 = vst.msk [vmem:[%s3 + $0x10] sm:$0xf] %vm304, %v276
  %310 = vst.msk [vmem:[%s3 + $0x14] sm:$0xf] %vm304, %v277
  %311 = vst.msk [vmem:[%s3 + $0x18] sm:$0xf] %vm304, %v278
  %312 = vst.msk [vmem:[%s3 + $0x1c] sm:$0xf] %vm304, %v279
  %313 = vst.msk [vmem:[%s3 + $0x20] sm:$0xf] %vm304, %v280
  %314 = vst.msk [vmem:[%s3 + $0x24] sm:$0xf] %vm304, %v281
  %315 = vst.msk [vmem:[%s3 + $0x28] sm:$0xf] %vm304, %v282
  %316 = vst.msk [vmem:[%s3 + $0x2c] sm:$0xf] %vm304, %v283
  %317 = vst.msk [vmem:[%s3 + $0x30] sm:$0xf] %vm304, %v284
  %318 = vst.msk [vmem:[%s3 + $0x34] sm:$0xf] %vm304, %v285
  %319 = vst.msk [vmem:[%s3 + $0x38] sm:$0xf] %vm304, %v286
  %320 = vst.msk [vmem:[%s3 + $0x3c] sm:$0xf] %vm304, %v287
  // Predicated region
  $region14: #{a_call__.2} parent=0 // pred_check
    _
  $region15: #{a_call__.2} parent=0 // pred_check_branch
    %322 = sbr.rel (0) target = $region17
  $region16: #{a_call__.2} parent=0 // pred_region
    _
  $region17: #{a_call__.2} parent=0 // pred_fallthru
    _
  // Predicated region
  $region18: #{a_call__.2} parent=0 // pred_check
    _
  $region19: #{a_call__.2} parent=0 // pred_check_branch
    %324 = sbr.rel (0) target = $region21
  $region20: #{a_call__.2} parent=0 // pred_region
    _
  $region21: #{a_call__.2} parent=0 // pred_fallthru
    _

// kernel: a_call__.3
$region0: #{a_call__.3}
  #allocation0 [shape = 'u32[]', space=smem, size = 0x4, offset = 0x4, fixed_abs, tag = 'smem constant byte address 0x4 - core index']
  #allocation1 [shape = 'u32[144,128]{1,0:T(1,128)}', space=vmem, size = 0x12000, scoped, tag = 'internal scratch']
  %s0 = inlined_call_operand.vmem [shape: bf16[2,110,8], index: 0, kind: input, shape index: {}]
  %s1 = inlined_call_operand.vmem [shape: bf16[9,8,8], index: 1, kind: input, shape index: {}]
  %s2 = inlined_call_operand.vmem [shape: f32[1,8], index: 2, kind: input, shape index: {}]
  %s3 = inlined_call_operand.vmem [shape: bf16[2,80,4], index: 3, kind: input, shape index: {}]
  %s4 = inlined_call_operand.vmem [shape: bf16[4,8], index: 4, kind: input, shape index: {}]
  %s5 = inlined_call_operand.vmem [shape: f32[2,80,8], index: 5, kind: output, shape index: {}]
  %s6 = sld [smem:[#allocation0]]
  $region53: #{a_call__.3} parent=0
    _
  %s8 = ssub.s32 1, %s6
  %s9 = scalar_select 0, %s8, %s6
  loop: start=0, step=1, limit=4
  $region2: #{a_call__.3} parent=0 // loop_pre_header
    _
  $region3: #{a_call__.3} parent=0 // loop_header
    %s11 = sphi 0, %s15
    %p12 = scmp.ge.s32.totalorder %s11, 4
    %s21 = sphi 0, %s23
    %s24 = sphi 0, %s21
    %s25 = sphi 0, %s24
    %s41 = sphi 0, %s25
    %s45 = sphi 0, %s45
    %s47 = sphi 0, %s45
    %s48 = sphi 0, %s47
    %s62 = sphi 0, %s48
    %s66 = sphi 0, %s66
    %s68 = sphi 0, %s66
    %s69 = sphi 0, %s68
    %s83 = sphi 0, %s69
    %s89 = sphi 0, %s91
    %s92 = sphi 0, %s89
    %s93 = sphi 0, %s92
    %s109 = sphi 0, %s93
    %s113 = sphi 0, %s113
    %s115 = sphi 0, %s113
    %s116 = sphi 0, %s115
    %s130 = sphi 0, %s116
    %s136 = sphi 0, %s138
    %s139 = sphi 0, %s136
    %s140 = sphi 0, %s139
    %s156 = sphi 0, %s140
  $region4: #{a_call__.3} parent=0 // loop_header_branch
    %14 = sbr.rel (%p12) target = $region8
  $region5: #{a_call__.3} parent=0 // loop_body
    %s16 = ssub.s32 %s11, 1
    %s17 = ssub.s32 %s11, 2
    %s18 = sadd.s32 %s11, 1
    %s19 = ssub.s32 %s11, %s18
    %p20 = scmp.eq.s32.totalorder %s19, 0
    %s22 = sadd.s32 %s21, 1
    %s23 = scalar_select %p20, %s21, %s22
    %p26 = pneg %p20
    %p27 = scmp.eq.s32.totalorder %s11, 1
    %p28 = por %p26, %p27
    %p29 = scmp.ne.s32.totalorder %s21, %s24
    %p30 = scmp.eq.s32.totalorder %s11, 0
    %p31 = por %p29, %p30
    %p32 = scmp.ne.s32.totalorder %s21, %s24
    %p33 = scmp.eq.s32.totalorder %s16, 1
    %p34 = por %p32, %p33
    %p35 = scmp.ne.s32.totalorder %s24, %s25
    %p36 = scmp.eq.s32.totalorder %s16, 0
    %p37 = por %p35, %p36
    %p38 = scmp.ne.s32.totalorder %s24, %s25
    %p39 = scmp.eq.s32.totalorder %s17, 1
    %p40 = por %p38, %p39
    %p42 = scmp.ne.s32.totalorder %s25, %s41
    %p43 = scmp.eq.s32.totalorder %s17, 0
    %p44 = por %p42, %p43
    %s46 = sadd.s32 %s45, 1
    %p49 = scmp.eq.s32.totalorder %s11, 1
    %p50 = scmp.ne.s32.totalorder %s45, %s47
    %p51 = scmp.eq.s32.totalorder %s11, 0
    %p52 = por %p50, %p51
    %p53 = scmp.ne.s32.totalorder %s45, %s47
    %p54 = scmp.eq.s32.totalorder %s16, 1
    %p55 = por %p53, %p54
    %p56 = scmp.ne.s32.totalorder %s47, %s48
    %p57 = scmp.eq.s32.totalorder %s16, 0
    %p58 = por %p56, %p57
    %p59 = scmp.ne.s32.totalorder %s47, %s48
    %p60 = scmp.eq.s32.totalorder %s17, 1
    %p61 = por %p59, %p60
    %p63 = scmp.ne.s32.totalorder %s48, %s62
    %p64 = scmp.eq.s32.totalorder %s17, 0
    %p65 = por %p63, %p64
    %s67 = sadd.s32 %s66, 1
    %p70 = scmp.eq.s32.totalorder %s11, 1
    %p71 = scmp.ne.s32.totalorder %s66, %s68
    %p72 = scmp.eq.s32.totalorder %s11, 0
    %p73 = por %p71, %p72
    %p74 = scmp.ne.s32.totalorder %s66, %s68
    %p75 = scmp.eq.s32.totalorder %s16, 1
    %p76 = por %p74, %p75
    %p77 = scmp.ne.s32.totalorder %s68, %s69
    %p78 = scmp.eq.s32.totalorder %s16, 0
    %p79 = por %p77, %p78
    %p80 = scmp.ne.s32.totalorder %s68, %s69
    %p81 = scmp.eq.s32.totalorder %s17, 1
    %p82 = por %p80, %p81
    %p84 = scmp.ne.s32.totalorder %s69, %s83
    %p85 = scmp.eq.s32.totalorder %s17, 0
    %p86 = por %p84, %p85
    %s87 = ssub.s32 %s11, %s18
    %p88 = scmp.eq.s32.totalorder %s87, 0
    %s90 = sadd.s32 %s89, 1
    %s91 = scalar_select %p88, %s89, %s90
    %p94 = pneg %p88
    %p95 = scmp.eq.s32.totalorder %s11, 1
    %p96 = por %p94, %p95
    %p97 = scmp.ne.s32.totalorder %s89, %s92
    %p98 = scmp.eq.s32.totalorder %s11, 0
    %p99 = por %p97, %p98
    %p100 = scmp.ne.s32.totalorder %s89, %s92
    %p101 = scmp.eq.s32.totalorder %s16, 1
    %p102 = por %p100, %p101
    %p103 = scmp.ne.s32.totalorder %s92, %s93
    %p104 = scmp.eq.s32.totalorder %s16, 0
    %p105 = por %p103, %p104
    %p106 = scmp.ne.s32.totalorder %s92, %s93
    %p107 = scmp.eq.s32.totalorder %s17, 1
    %p108 = por %p106, %p107
    %p110 = scmp.ne.s32.totalorder %s93, %s109
    %p111 = scmp.eq.s32.totalorder %s17, 0
    %p112 = por %p110, %p111
    %s114 = sadd.s32 %s113, 1
    %p117 = scmp.eq.s32.totalorder %s11, 1
    %p118 = scmp.ne.s32.totalorder %s113, %s115
    %p119 = scmp.eq.s32.totalorder %s11, 0
    %p120 = por %p118, %p119
    %p121 = scmp.ne.s32.totalorder %s113, %s115
    %p122 = scmp.eq.s32.totalorder %s16, 1
    %p123 = por %p121, %p122
    %p124 = scmp.ne.s32.totalorder %s115, %s116
    %p125 = scmp.eq.s32.totalorder %s16, 0
    %p126 = por %p124, %p125
    %p127 = scmp.ne.s32.totalorder %s115, %s116
    %p128 = scmp.eq.s32.totalorder %s17, 1
    %p129 = por %p127, %p128
    %p131 = scmp.ne.s32.totalorder %s116, %s130
    %p132 = scmp.eq.s32.totalorder %s17, 0
    %p133 = por %p131, %p132
    %s134 = ssub.s32 %s11, %s18
    %p135 = scmp.eq.s32.totalorder %s134, 0
    %s137 = sadd.s32 %s136, 1
    %s138 = scalar_select %p135, %s136, %s137
    %p141 = pneg %p135
    %p142 = scmp.eq.s32.totalorder %s11, 1
    %p143 = por %p141, %p142
    %p144 = scmp.ne.s32.totalorder %s136, %s139
    %p145 = scmp.eq.s32.totalorder %s11, 0
    %p146 = por %p144, %p145
    %p147 = scmp.ne.s32.totalorder %s136, %s139
    %p148 = scmp.eq.s32.totalorder %s16, 1
    %p149 = por %p147, %p148
    %p150 = scmp.ne.s32.totalorder %s139, %s140
    %p151 = scmp.eq.s32.totalorder %s16, 0
    %p152 = por %p150, %p151
    %p153 = scmp.ne.s32.totalorder %s139, %s140
    %p154 = scmp.eq.s32.totalorder %s17, 1
    %p155 = por %p153, %p154
    %p157 = scmp.ne.s32.totalorder %s140, %s156
    %p158 = scmp.eq.s32.totalorder %s17, 0
    %p159 = por %p157, %p158
    %p160 = scmp.le.s32.totalorder 1, %s11
    %p161 = scmp.lt.s32.totalorder %s11, 3
    %p162 = pnand %p160, %p161
    %p163 = pneg %p162
    // Predicated region
    $region9: #{a_call__.3} parent=5 // pred_check
      _
    $region10: #{a_call__.3} parent=5 // pred_check_branch
      %165 = sbr.rel (%p162) target = $region12
    $region11: #{a_call__.3} parent=5 // pred_region
      %s166 = ssub.s32 %s11, 1
      // Predicated region
      $region13: #{a_call__.3} parent=11 // pred_check
        %p167 = pneg %p58
      $region14: #{a_call__.3} parent=11 // pred_check_branch
        %169 = sbr.rel (%p167) target = $region16
      $region15: #{a_call__.3} parent=11 // pred_region
        _
      $region16: #{a_call__.3} parent=11 // pred_fallthru
        _
      // Predicated region
      $region17: #{a_call__.3} parent=11 // pred_check
        %p170 = pneg %p79
      $region18: #{a_call__.3} parent=11 // pred_check_branch
        %172 = sbr.rel (%p170) target = $region20
      $region19: #{a_call__.3} parent=11 // pred_region
        _
      $region20: #{a_call__.3} parent=11 // pred_fallthru
        _
      // Predicated region
      $region21: #{a_call__.3} parent=11 // pred_check
        %p173 = pneg %p126
      $region22: #{a_call__.3} parent=11 // pred_check_branch
        %175 = sbr.rel (%p173) target = $region24
      $region23: #{a_call__.3} parent=11 // pred_region
        _
      $region24: #{a_call__.3} parent=11 // pred_fallthru
        _
    $region12: #{a_call__.3} parent=5 // pred_fallthru
      _
    %p176 = scmp.lt.s32.totalorder %s11, 2
    // Predicated region
    $region25: #{a_call__.3} parent=5 // pred_check
      %p177 = pneg %p176
    $region26: #{a_call__.3} parent=5 // pred_check_branch
      %179 = sbr.rel (%p177) target = $region28
    $region27: #{a_call__.3} parent=5 // pred_region
      // Predicated region
      $region29: #{a_call__.3} parent=27 // pred_check
        %p180 = pneg %p31
      $region30: #{a_call__.3} parent=27 // pred_check_branch
        %182 = sbr.rel (%p180) target = $region32
      $region31: #{a_call__.3} parent=27 // pred_region
        %p183 = scmp.lt.s32.totalorder %s11, 1
        %s184 = scalar_select %p183, %s11, 1
        %s185 = smul.addr %s184, 14
        %s186 = smul.addr %s185, 4
        %s187 = scalar_lea.vmem %s0, %s186
      $region32: #{a_call__.3} parent=27 // pred_fallthru
        _
      // Predicated region
      $region33: #{a_call__.3} parent=27 // pred_check
        %p188 = pneg %p99
      $region34: #{a_call__.3} parent=27 // pred_check_branch
        %190 = sbr.rel (%p188) target = $region36
      $region35: #{a_call__.3} parent=27 // pred_region
        %p191 = scmp.lt.s32.totalorder %s11, 1
        %s192 = scalar_select %p191, %s11, 1
        %s193 = smul.addr %s192, 10
        %s194 = smul.addr %s193, 4
        %s195 = scalar_lea.vmem %s3, %s194
      $region36: #{a_call__.3} parent=27 // pred_fallthru
        _
    $region28: #{a_call__.3} parent=5 // pred_fallthru
      _
    %p196 = scmp.le.s32.totalorder 1, %s11
    %p197 = scmp.lt.s32.totalorder %s11, 3
    %p198 = pnand %p196, %p197
    %p199 = pneg %p198
    // Predicated region
    $region37: #{a_call__.3} parent=5 // pred_check
      _
    $region38: #{a_call__.3} parent=5 // pred_check_branch
      %201 = sbr.rel (%p198) target = $region40
    $region39: #{a_call__.3} parent=5 // pred_region
      %s202 = ssub.s32 %s11, 1
      %p203 = scmp.lt.s32.totalorder %s16, 1
      %s204 = scalar_select %p203, %s16, 1
      %s205 = smul.addr %s204, 14
      %s206 = smul.addr %s205, 4
      %s207 = scalar_lea.vmem %s0, %s206
      %p208 = pneg %p37
      %p209 = pneg %p34
      %p210 = pneg %p58
      %p211 = pneg %p55
      %p212 = pneg %p79
      %p213 = pneg %p76
      %p214 = scmp.lt.s32.totalorder %s16, 1
      %s215 = scalar_select %p214, %s16, 1
      %s216 = smul.addr %s215, 10
      %s217 = smul.addr %s216, 4
      %s218 = scalar_lea.vmem %s3, %s217
      %p219 = pneg %p105
      %p220 = pneg %p102
      %p221 = pneg %p126
      %p222 = pneg %p123
      %p223 = pneg %p152
      %p224 = pneg %p149
      %p225 = scmp.lt.s32.totalorder %s16, 1
      %s226 = scalar_select %p225, %s16, 1
      %s227 = smul.addr %s226, 10
      %s228 = smul.addr %s227, 8
      %s229 = scalar_lea.vmem %s5, %s228
      %p230 = scmp.lt.s32.totalorder %s16, 1
      %s231 = scalar_select %p230, %s16, 1
      %s232 = smul.addr %s231, 14
      %s233 = smul.addr %s232, 4
      %s234 = scalar_lea.vmem %s0, %s233
      %p235 = scmp.lt.s32.totalorder %s16, 1
      %s236 = scalar_select %p235, %s16, 1
      %s237 = smul.addr %s236, 10
      %s238 = smul.addr %s237, 4
      %s239 = scalar_lea.vmem %s3, %s238
      %p240 = scmp.lt.s32.totalorder %s16, 1
      %s241 = scalar_select %p240, %s16, 1
      %s242 = smul.addr %s241, 10
      %s243 = smul.addr %s242, 8
      %s244 = scalar_lea.vmem %s5, %s243
      %v246 = vld [vmem:[%s239] sm:$0xf]
      %v247 = vld [vmem:[%s239 + $0x4] sm:$0xf]
      %v248 = vld [vmem:[%s239 + $0x8] sm:$0xf]
      %v249 = vld [vmem:[%s239 + $0xc] sm:$0xf]
      %v250 = vld [vmem:[%s239 + $0x10] sm:$0xf]
      %v251 = vld [vmem:[%s239 + $0x14] sm:$0xf]
      %v252 = vld [vmem:[%s239 + $0x18] sm:$0xf]
      %v253 = vld [vmem:[%s239 + $0x1c] sm:$0xf]
      %v254 = vld [vmem:[%s239 + $0x20] sm:$0xf]
      %v255 = vld [vmem:[%s239 + $0x24] sm:$0xf]
      %v256 = vld [vmem:[%s4] sm:$0x3]
      %v257 = vld [vmem:[%s234] sm:$0xf]
      %v258 = vld [vmem:[%s234 + $0x4] sm:$0xf]
      %v259 = vld [vmem:[%s234 + $0x8] sm:$0xf]
      %v260 = vld [vmem:[%s234 + $0xc] sm:$0xf]
      %v261 = vld [vmem:[%s234 + $0x10] sm:$0xf]
      %v262 = vld [vmem:[%s234 + $0x14] sm:$0xf]
      %v263 = vld [vmem:[%s234 + $0x18] sm:$0xf]
      %v264 = vld [vmem:[%s234 + $0x1c] sm:$0xf]
      %v265 = vld [vmem:[%s234 + $0x20] sm:$0xf]
      %v266 = vld [vmem:[%s234 + $0x24] sm:$0xf]
      %v267 = vld [vmem:[%s1] sm:$0xf]
      %v268 = vld [vmem:[%s234 + $0x28] sm:$0x1]
      %s269 = scalar_lea.vmem %s1, 4
      %v270 = vld [vmem:[%s269] sm:$0xf]
      %v282 = vunpack.c.l.b16 %v257
      %v283 = vunpack.c.l.b16 %v258
      %v284 = vunpack.c.l.b16 %v259
      %v285 = vunpack.c.l.b16 %v260
      %v286 = vunpack.c.l.b16 %v261
      %v287 = vunpack.c.l.b16 %v262
      %v288 = vunpack.c.l.b16 %v263
      %v289 = vunpack.c.l.b16 %v264
      %v290 = vunpack.c.l.b16 %v265
      %v291 = vunpack.c.l.b16 %v266
      %v292 = vunpack.c.l.b16 %v268
      %v293 = vpack.c.b16 %v283, %v282
      %v294 = vpack.c.b16 %v285, %v284
      %v295 = vpack.c.b16 %v287, %v286
      %v296 = vpack.c.b16 %v289, %v288
      %v297 = vpack.c.b16 %v291, %v290
      %v298 = vpack.c.b16 %v292, %v292
      %vm299 = vsmask.f32 7424
      %v301 = vshrl.u32 %v293, 16
      %v303 = vshll.u32 %v293, 16
      %v305 = vrot.slane %v303, 1
      %v306 = vor.u32 %v301, %v305
      %v308 = vshll.u32 %v294, 16
      %v310 = vrot.slane %v308, 1
      %v311 = vsel %vm299, %v306, %v310
      %v312 = vshrl.u32 %v294, 16
      %v314 = vor.u32 %v312, %v310
      %v316 = vshll.u32 %v295, 16
      %v318 = vrot.slane %v316, 1
      %v319 = vsel %vm299, %v314, %v318
      %v320 = vshrl.u32 %v295, 16
      %v322 = vor.u32 %v320, %v318
      %v324 = vshll.u32 %v296, 16
      %v326 = vrot.slane %v324, 1
      %v327 = vsel %vm299, %v322, %v326
      %v328 = vshrl.u32 %v296, 16
      %v330 = vor.u32 %v328, %v326
      %v332 = vshll.u32 %v297, 16
      %v334 = vrot.slane %v332, 1
      %v335 = vsel %vm299, %v330, %v334
      %v336 = vshrl.u32 %v297, 16
      %v338 = vor.u32 %v336, %v334
      %v340 = vshll.u32 %v298, 16
      %v342 = vrot.slane %v340, 1
      %v343 = vsel %vm299, %v338, %v342
      %vm344 = vcmask 64512
      %v346 = vsel %vm344, %v311, 0
      %v349 = vsel %vm344, %v319, 0
      %v352 = vsel %vm344, %v327, 0
      %v355 = vsel %vm344, %v335, 0
      %v358 = vsel %vm344, %v343, 0
      %vm360 = vcmask 1043456
      %v362 = vsel %vm360, %v270, 0
      %364 = vmatprep.subr.bf16.mxu0 0
      %365 = vmatpush1.bf16.msra.mxu0 %v362
      %366 = vmatprep.subr.bf16.mxu0 0
      %367 = vmatpush1.bf16.msra.mxu0 0
      %368 = vmatprep.subr.bf16.mxu0 0
      %369 = vmatpush1.bf16.msra.mxu0 0
      %370 = vmatprep.subr.bf16.mxu0 0
      %371 = vmatpush1.bf16.msra.mxu0 0
      %372 = vmatprep.subr.bf16.mxu0 0
      %373 = vmatpush1.bf16.msra.mxu0 0
      %374 = vmatprep.subr.bf16.mxu0 0
      %375 = vmatpush1.bf16.msra.mxu0 0
      %376 = vmatprep.subr.bf16.mxu0 0
      %377 = vmatpush1.bf16.msra.mxu0 0
      %378 = vmatprep.subr.bf16.mxu0 0
      %379 = vmatpush1.bf16.msra.mxu0 0
      %380 = vmatprep.subr.bf16.mxu0 0
      %381 = vmatpush1.bf16.msra.mxu0 0
      %382 = vmatprep.subr.bf16.mxu0 0
      %383 = vmatpush1.bf16.msra.mxu0 0
      %384 = vmatprep.subr.bf16.mxu0 0
      %385 = vmatpush1.bf16.msra.mxu0 0
      %386 = vmatprep.subr.bf16.mxu0 0
      %387 = vmatpush1.bf16.msra.mxu0 0
      %388 = vmatprep.subr.bf16.mxu0 0
      %389 = vmatpush1.bf16.msra.mxu0 0
      %390 = vmatprep.subr.bf16.mxu0 0
      %391 = vmatpush1.bf16.msra.mxu0 0
      %392 = vmatprep.subr.bf16.mxu0 0
      %393 = vmatpush1.bf16.msra.mxu0 0
      %394 = vmatprep.subr.bf16.mxu0 0
      %395 = vmatpush1.bf16.msra.mxu0 0
      %396 = vmatprep.mubr.bf16.mxu0 0
      %397 = vmatmul.mubr.bf16.gmra.mrb[0].mxu0 %v346
      %v398 = vpop.f32.mrb[0].mxu0
      %v399 = vadd.f32 0.0, %v398
      %v400 = vpop.f32.mrb[0].mxu0
      %v401 = vpop.f32.mrb[0].mxu0
      %v402 = vadd.f32 0.0, %v401
      %v403 = vpop.f32.mrb[0].mxu0
      %404 = vmatprep.mubr.bf16.mxu0 0
      %405 = vmatmul.mubr.bf16.gmra.mrb[0].mxu0 %v349
      %v406 = vpop.f32.mrb[0].mxu0
      %v407 = vadd.f32 0.0, %v406
      %v408 = vpop.f32.mrb[0].mxu0
      %v409 = vpop.f32.mrb[0].mxu0
      %v410 = vadd.f32 0.0, %v409
      %v411 = vpop.f32.mrb[0].mxu0
      %412 = vmatprep.mubr.bf16.mxu0 0
      %413 = vmatmul.mubr.bf16.gmra.mrb[0].mxu0 %v352
      %v414 = vpop.f32.mrb[0].mxu0
      %v415 = vadd.f32 0.0, %v414
      %v416 = vpop.f32.mrb[0].mxu0
      %v417 = vpop.f32.mrb[0].mxu0
      %v418 = vadd.f32 0.0, %v417
      %v419 = vpop.f32.mrb[0].mxu0
      %420 = vmatprep.mubr.bf16.mxu0 0
      %421 = vmatmul.mubr.bf16.gmra.mrb[0].mxu0 %v355
      %v422 = vpop.f32.mrb[0].mxu0
      %v423 = vadd.f32 0.0, %v422
      %v424 = vpop.f32.mrb[0].mxu0
      %v425 = vpop.f32.mrb[0].mxu0
      %v426 = vadd.f32 0.0, %v425
      %v427 = vpop.f32.mrb[0].mxu0
      %428 = vmatprep.mubr.bf16.mxu0 0
      %429 = vmatmul.mubr.bf16.gmra.mrb[0].mxu0 %v358
      %v430 = vpop.f32.mrb[0].mxu0
      %v431 = vadd.f32 0.0, %v430
      %v432 = vpop.f32.mrb[0].mxu0
      %v433 = vpop.f32.mrb[0].mxu0
      %v434 = vadd.f32 0.0, %v433
      %v435 = vpop.f32.mrb[0].mxu0
      %436 = vdwg.mxu0
      %v437 = vsel %vm344, %v293, 0
      %v439 = vsel %vm344, %v294, 0
      %v441 = vsel %vm344, %v295, 0
      %v443 = vsel %vm344, %v296, 0
      %v445 = vsel %vm344, %v297, 0
      %v448 = vsel %vm360, %v267, 0
      %450 = vmatprep.subr.bf16.mxu0 0
      %451 = vmatpush1.bf16.msra.mxu0 %v448
      %452 = vmatprep.subr.bf16.mxu0 0
      %453 = vmatpush1.bf16.msra.mxu0 0
      %454 = vmatprep.subr.bf16.mxu0 0
      %455 = vmatpush1.bf16.msra.mxu0 0
      %456 = vmatprep.subr.bf16.mxu0 0
      %457 = vmatpush1.bf16.msra.mxu0 0
      %458 = vmatprep.subr.bf16.mxu0 0
      %459 = vmatpush1.bf16.msra.mxu0 0
      %460 = vmatprep.subr.bf16.mxu0 0
      %461 = vmatpush1.bf16.msra.mxu0 0
      %462 = vmatprep.subr.bf16.mxu0 0
      %463 = vmatpush1.bf16.msra.mxu0 0
      %464 = vmatprep.subr.bf16.mxu0 0
      %465 = vmatpush1.bf16.msra.mxu0 0
      %466 = vmatprep.subr.bf16.mxu0 0
      %467 = vmatpush1.bf16.msra.mxu0 0
      %468 = vmatprep.subr.bf16.mxu0 0
      %469 = vmatpush1.bf16.msra.mxu0 0
      %470 = vmatprep.subr.bf16.mxu0 0
      %471 = vmatpush1.bf16.msra.mxu0 0
      %472 = vmatprep.subr.bf16.mxu0 0
      %473 = vmatpush1.bf16.msra.mxu0 0
      %474 = vmatprep.subr.bf16.mxu0 0
      %475 = vmatpush1.bf16.msra.mxu0 0
      %476 = vmatprep.subr.bf16.mxu0 0
      %477 = vmatpush1.bf16.msra.mxu0 0
      %478 = vmatprep.subr.bf16.mxu0 0
      %479 = vmatpush1.bf16.msra.mxu0 0
      %480 = vmatprep.subr.bf16.mxu0 0
      %481 = vmatpush1.bf16.msra.mxu0 0
      %482 = vmatprep.mubr.bf16.mxu0 0
      %483 = vmatmul.mubr.bf16.gmra.mrb[0].mxu0 %v437
      %v484 = vpop.f32.mrb[0].mxu0
      %v485 = vadd.f32 %v399, %v484
      %v486 = vpop.f32.mrb[0].mxu0
      %v487 = vpop.f32.mrb[0].mxu0
      %v488 = vadd.f32 %v402, %v487
      %v489 = vpop.f32.mrb[0].mxu0
      %490 = vmatprep.mubr.bf16.mxu0 0
      %491 = vmatmul.mubr.bf16.gmra.mrb[0].mxu0 %v439
      %v492 = vpop.f32.mrb[0].mxu0
      %v493 = vadd.f32 %v407, %v492
      %v494 = vpop.f32.mrb[0].mxu0
      %v495 = vpop.f32.mrb[0].mxu0
      %v496 = vadd.f32 %v410, %v495
      %v497 = vpop.f32.mrb[0].mxu0
      %498 = vmatprep.mubr.bf16.mxu0 0
      %499 = vmatmul.mubr.bf16.gmra.mrb[0].mxu0 %v441
      %v500 = vpop.f32.mrb[0].mxu0
      %v501 = vadd.f32 %v415, %v500
      %v502 = vpop.f32.mrb[0].mxu0
      %v503 = vpop.f32.mrb[0].mxu0
      %v504 = vadd.f32 %v418, %v503
      %v505 = vpop.f32.mrb[0].mxu0
      %506 = vmatprep.mubr.bf16.mxu0 0
      %507 = vmatmul.mubr.bf16.gmra.mrb[0].mxu0 %v443
      %v508 = vpop.f32.mrb[0].mxu0
      %v509 = vadd.f32 %v423, %v508
      %v510 = vpop.f32.mrb[0].mxu0
      %v511 = vpop.f32.mrb[0].mxu0
      %v512 = vadd.f32 %v426, %v511
      %v513 = vpop.f32.mrb[0].mxu0
      %514 = vmatprep.mubr.bf16.mxu0 0
      %515 = vmatmul.mubr.bf16.gmra.mrb[0].mxu0 %v445
      %v516 = vpop.f32.mrb[0].mxu0
      %v517 = vadd.f32 %v431, %v516
      %v518 = vpop.f32.mrb[0].mxu0
      %v519 = vpop.f32.mrb[0].mxu0
      %v520 = vadd.f32 %v434, %v519
      %v521 = vpop.f32.mrb[0].mxu0
      %522 = vdwg.mxu0
      %v523 = vld [vmem:[%s234] sm:$0xe]
      %s524 = scalar_lea.vmem %s1, 8
      %v525 = vld [vmem:[%s524] sm:$0xf]
      %v527 = vunpack.c.l.b16 %v523
      %v528 = vpack.c.b16 %v283, %v527
      %vm529 = vcmask 1046528
      %v530 = vrot.slane %v528, 1
      %v531 = vrot.slane %v294, 1
      %v532 = vsel %vm529, %v530, %v531
      %v533 = vrot.slane %v295, 1
      %v534 = vsel %vm529, %v531, %v533
      %v535 = vrot.slane %v296, 1
      %v536 = vsel %vm529, %v533, %v535
      %v537 = vrot.slane %v297, 1
      %v538 = vsel %vm529, %v535, %v537
      %v539 = vrot.slane %v298, 1
      %v540 = vsel %vm529, %v537, %v539
      %v542 = vsel %vm344, %v532, 0
      %v545 = vsel %vm344, %v534, 0
      %v548 = vsel %vm344, %v536, 0
      %v551 = vsel %vm344, %v538, 0
      %v554 = vsel %vm344, %v540, 0
      %v557 = vsel %vm360, %v525, 0
      %559 = vmatprep.subr.bf16.mxu0 0
      %560 = vmatpush1.bf16.msra.mxu0 %v557
      %561 = vmatprep.subr.bf16.mxu0 0
      %562 = vmatpush1.bf16.msra.mxu0 0
      %563 = vmatprep.subr.bf16.mxu0 0
      %564 = vmatpush1.bf16.msra.mxu0 0
      %565 = vmatprep.subr.bf16.mxu0 0
      %566 = vmatpush1.bf16.msra.mxu0 0
      %567 = vmatprep.subr.bf16.mxu0 0
      %568 = vmatpush1.bf16.msra.mxu0 0
      %569 = vmatprep.subr.bf16.mxu0 0
      %570 = vmatpush1.bf16.msra.mxu0 0
      %571 = vmatprep.subr.bf16.mxu0 0
      %572 = vmatpush1.bf16.msra.mxu0 0
      %573 = vmatprep.subr.bf16.mxu0 0
      %574 = vmatpush1.bf16.msra.mxu0 0
      %575 = vmatprep.subr.bf16.mxu0 0
      %576 = vmatpush1.bf16.msra.mxu0 0
      %577 = vmatprep.subr.bf16.mxu0 0
      %578 = vmatpush1.bf16.msra.mxu0 0
      %579 = vmatprep.subr.bf16.mxu0 0
      %580 = vmatpush1.bf16.msra.mxu0 0
      %581 = vmatprep.subr.bf16.mxu0 0
      %582 = vmatpush1.bf16.msra.mxu0 0
      %583 = vmatprep.subr.bf16.mxu0 0
      %584 = vmatpush1.bf16.msra.mxu0 0
      %585 = vmatprep.subr.bf16.mxu0 0
      %586 = vmatpush1.bf16.msra.mxu0 0
      %587 = vmatprep.subr.bf16.mxu0 0
      %588 = vmatpush1.bf16.msra.mxu0 0
      %589 = vmatprep.subr.bf16.mxu0 0
      %590 = vmatpush1.bf16.msra.mxu0 0
      %591 = vmatprep.mubr.bf16.mxu0 0
      %592 = vmatmul.mubr.bf16.gmra.mrb[0].mxu0 %v542
      %v593 = vpop.f32.mrb[0].mxu0
      %v594 = vadd.f32 0.0, %v593
      %v595 = vpop.f32.mrb[0].mxu0
      %v596 = vpop.f32.mrb[0].mxu0
      %v597 = vadd.f32 0.0, %v596
      %v598 = vpop.f32.mrb[0].mxu0
      %599 = vmatprep.mubr.bf16.mxu0 0
      %600 = vmatmul.mubr.bf16.gmra.mrb[0].mxu0 %v545
      %v601 = vpop.f32.mrb[0].mxu0
      %v602 = vadd.f32 0.0, %v601
      %v603 = vpop.f32.mrb[0].mxu0
      %v604 = vpop.f32.mrb[0].mxu0
      %v605 = vadd.f32 0.0, %v604
      %v606 = vpop.f32.mrb[0].mxu0
      %607 = vmatprep.mubr.bf16.mxu0 0
      %608 = vmatmul.mubr.bf16.gmra.mrb[0].mxu0 %v548
      %v609 = vpop.f32.mrb[0].mxu0
      %v610 = vadd.f32 0.0, %v609
      %v611 = vpop.f32.mrb[0].mxu0
      %v612 = vpop.f32.mrb[0].mxu0
      %v613 = vadd.f32 0.0, %v612
      %v614 = vpop.f32.mrb[0].mxu0
      %615 = vmatprep.mubr.bf16.mxu0 0
      %616 = vmatmul.mubr.bf16.gmra.mrb[0].mxu0 %v551
      %v617 = vpop.f32.mrb[0].mxu0
      %v618 = vadd.f32 0.0, %v617
      %v619 = vpop.f32.mrb[0].mxu0
      %v620 = vpop.f32.mrb[0].mxu0
      %v621 = vadd.f32 0.0, %v620
      %v622 = vpop.f32.mrb[0].mxu0
      %623 = vmatprep.mubr.bf16.mxu0 0
      %624 = vmatmul.mubr.bf16.gmra.mrb[0].mxu0 %v554
      %v625 = vpop.f32.mrb[0].mxu0
      %v626 = vadd.f32 0.0, %v625
      %v627 = vpop.f32.mrb[0].mxu0
      %v628 = vpop.f32.mrb[0].mxu0
      %v629 = vadd.f32 0.0, %v628
      %v630 = vpop.f32.mrb[0].mxu0
      %631 = vdwg.mxu0
      %v632 = vadd.f32 %v485, %v594
      %v633 = vadd.f32 %v488, %v597
      %v634 = vadd.f32 %v493, %v602
      %v635 = vadd.f32 %v496, %v605
      %v636 = vadd.f32 %v501, %v610
      %v637 = vadd.f32 %v504, %v613
      %v638 = vadd.f32 %v509, %v618
      %v639 = vadd.f32 %v512, %v621
      %v640 = vadd.f32 %v517, %v626
      %v641 = vadd.f32 %v520, %v629
      %v642 = vld [vmem:[%s234 + $0x4] sm:$0xe]
      %v643 = vld [vmem:[%s234 + $0x8] sm:$0xf]
      %v644 = vld [vmem:[%s234 + $0xc] sm:$0xf]
      %v645 = vld [vmem:[%s234 + $0x10] sm:$0xf]
      %v646 = vld [vmem:[%s234 + $0x14] sm:$0xf]
      %v647 = vld [vmem:[%s234 + $0x18] sm:$0xf]
      %v648 = vld [vmem:[%s234 + $0x1c] sm:$0xf]
      %v649 = vld [vmem:[%s234 + $0x20] sm:$0xf]
      %v650 = vld [vmem:[%s234 + $0x24] sm:$0xf]
      %v651 = vld [vmem:[%s234 + $0x28] sm:$0xf]
      %v652 = vld [vmem:[%s234 + $0x2c] sm:$0x1]
      %s653 = scalar_lea.vmem %s1, 12
      %v654 = vld [vmem:[%s653] sm:$0xf]
      %v666 = vunpack.c.l.b16 %v642
      %v667 = vunpack.c.l.b16 %v643
      %v668 = vunpack.c.l.b16 %v644
      %v669 = vunpack.c.l.b16 %v645
      %v670 = vunpack.c.l.b16 %v646
      %v671 = vunpack.c.l.b16 %v647
      %v672 = vunpack.c.l.b16 %v648
      %v673 = vunpack.c.l.b16 %v649
      %v674 = vunpack.c.l.b16 %v650
      %v675 = vunpack.c.l.b16 %v651
      %v676 = vunpack.c.l.b16 %v652
      %v677 = vpack.c.b16 %v667, %v666
      %v678 = vpack.c.b16 %v669, %v668
      %v679 = vpack.c.b16 %v671, %v670
      %v680 = vpack.c.b16 %v673, %v672
      %v681 = vpack.c.b16 %v675, %v674
      %v682 = vpack.c.b16 %v676, %v676
      %v683 = vrot.slane %v677, 1
      %v684 = vrot.slane %v678, 1
      %v685 = vsel %vm529, %v683, %v684
      %v686 = vrot.slane %v679, 1
      %v687 = vsel %vm529, %v684, %v686
      %v688 = vrot.slane %v680, 1
      %v689 = vsel %vm529, %v686, %v688
      %v690 = vrot.slane %v681, 1
      %v691 = vsel %vm529, %v688, %v690
      %v692 = vrot.slane %v682, 1
      %v693 = vsel %vm529, %v690, %v692
      %v695 = vsel %vm344, %v685, 0
      %v698 = vsel %vm344, %v687, 0
      %v701 = vsel %vm344, %v689, 0
      %v704 = vsel %vm344, %v691, 0
      %v707 = vsel %vm344, %v693, 0
      %v710 = vsel %vm360, %v654, 0
      %712 = vmatprep.subr.bf16.mxu0 0
      %713 = vmatpush1.bf16.msra.mxu0 %v710
      %714 = vmatprep.subr.bf16.mxu0 0
      %715 = vmatpush1.bf16.msra.mxu0 0
      %716 = vmatprep.subr.bf16.mxu0 0
      %717 = vmatpush1.bf16.msra.mxu0 0
      %718 = vmatprep.subr.bf16.mxu0 0
      %719 = vmatpush1.bf16.msra.mxu0 0
      %720 = vmatprep.subr.bf16.mxu0 0
      %721 = vmatpush1.bf16.msra.mxu0 0
      %722 = vmatprep.subr.bf16.mxu0 0
      %723 = vmatpush1.bf16.msra.mxu0 0
      %724 = vmatprep.subr.bf16.mxu0 0
      %725 = vmatpush1.bf16.msra.mxu0 0
      %726 = vmatprep.subr.bf16.mxu0 0
      %727 = vmatpush1.bf16.msra.mxu0 0
      %728 = vmatprep.subr.bf16.mxu0 0
      %729 = vmatpush1.bf16.msra.mxu0 0
      %730 = vmatprep.subr.bf16.mxu0 0
      %731 = vmatpush1.bf16.msra.mxu0 0
      %732 = vmatprep.subr.bf16.mxu0 0
      %733 = vmatpush1.bf16.msra.mxu0 0
      %734 = vmatprep.subr.bf16.mxu0 0
      %735 = vmatpush1.bf16.msra.mxu0 0
      %736 = vmatprep.subr.bf16.mxu0 0
      %737 = vmatpush1.bf16.msra.mxu0 0
      %738 = vmatprep.subr.bf16.mxu0 0
      %739 = vmatpush1.bf16.msra.mxu0 0
      %740 = vmatprep.subr.bf16.mxu0 0
      %741 = vmatpush1.bf16.msra.mxu0 0
      %742 = vmatprep.subr.bf16.mxu0 0
      %743 = vmatpush1.bf16.msra.mxu0 0
      %744 = vmatprep.mubr.bf16.mxu0 0
      %745 = vmatmul.mubr.bf16.gmra.mrb[0].mxu0 %v695
      %v746 = vpop.f32.mrb[0].mxu0
      %v747 = vadd.f32 0.0, %v746
      %v748 = vpop.f32.mrb[0].mxu0
      %v749 = vpop.f32.mrb[0].mxu0
      %v750 = vadd.f32 0.0, %v749
      %v751 = vpop.f32.mrb[0].mxu0
      %752 = vmatprep.mubr.bf16.mxu0 0
      %753 = vmatmul.mubr.bf16.gmra.mrb[0].mxu0 %v698
      %v754 = vpop.f32.mrb[0].mxu0
      %v755 = vadd.f32 0.0, %v754
      %v756 = vpop.f32.mrb[0].mxu0
      %v757 = vpop.f32.mrb[0].mxu0
      %v758 = vadd.f32 0.0, %v757
      %v759 = vpop.f32.mrb[0].mxu0
      %760 = vmatprep.mubr.bf16.mxu0 0
      %761 = vmatmul.mubr.bf16.gmra.mrb[0].mxu0 %v701
      %v762 = vpop.f32.mrb[0].mxu0
      %v763 = vadd.f32 0.0, %v762
      %v764 = vpop.f32.mrb[0].mxu0
      %v765 = vpop.f32.mrb[0].mxu0
      %v766 = vadd.f32 0.0, %v765
      %v767 = vpop.f32.mrb[0].mxu0
      %768 = vmatprep.mubr.bf16.mxu0 0
      %769 = vmatmul.mubr.bf16.gmra.mrb[0].mxu0 %v704
      %v770 = vpop.f32.mrb[0].mxu0
      %v771 = vadd.f32 0.0, %v770
      %v772 = vpop.f32.mrb[0].mxu0
      %v773 = vpop.f32.mrb[0].mxu0
      %v774 = vadd.f32 0.0, %v773
      %v775 = vpop.f32.mrb[0].mxu0
      %776 = vmatprep.mubr.bf16.mxu0 0
      %777 = vmatmul.mubr.bf16.gmra.mrb[0].mxu0 %v707
      %v778 = vpop.f32.mrb[0].mxu0
      %v779 = vadd.f32 0.0, %v778
      %v780 = vpop.f32.mrb[0].mxu0
      %v781 = vpop.f32.mrb[0].mxu0
      %v782 = vadd.f32 0.0, %v781
      %v783 = vpop.f32.mrb[0].mxu0
      %784 = vdwg.mxu0
      %v785 = vadd.f32 %v632, %v747
      %v786 = vadd.f32 %v633, %v750
      %v787 = vadd.f32 %v634, %v755
      %v788 = vadd.f32 %v635, %v758
      %v789 = vadd.f32 %v636, %v763
      %v790 = vadd.f32 %v637, %v766
      %v791 = vadd.f32 %v638, %v771
      %v792 = vadd.f32 %v639, %v774
      %v793 = vadd.f32 %v640, %v779
      %v794 = vadd.f32 %v641, %v782
      %v795 = vld [vmem:[%s234 + $0x2c] sm:$0x3]
      %s796 = scalar_lea.vmem %s1, 16
      %v797 = vld [vmem:[%s796] sm:$0xf]
      %v799 = vunpack.c.l.b16 %v795
      %v800 = vpack.c.b16 %v799, %v799
      %vm801 = vsmask.f32 6400
      %v803 = vshrl.u32 %v677, 16
      %v805 = vrot.slane %v803, 1
      %v806 = vshll.u32 %v677, 16
      %v808 = vrot.slane %v806, 2
      %v809 = vor.u32 %v805, %v808
      %v811 = vshrl.u32 %v678, 16
      %v813 = vrot.slane %v811, 1
      %v814 = vshll.u32 %v678, 16
      %v816 = vrot.slane %v814, 2
      %v817 = vor.u32 %v813, %v816
      %v818 = vsel %vm801, %v809, %v817
      %v820 = vshrl.u32 %v679, 16
      %v822 = vrot.slane %v820, 1
      %v823 = vshll.u32 %v679, 16
      %v825 = vrot.slane %v823, 2
      %v826 = vor.u32 %v822, %v825
      %v827 = vsel %vm801, %v817, %v826
      %v829 = vshrl.u32 %v680, 16
      %v831 = vrot.slane %v829, 1
      %v832 = vshll.u32 %v680, 16
      %v834 = vrot.slane %v832, 2
      %v835 = vor.u32 %v831, %v834
      %v836 = vsel %vm801, %v826, %v835
      %v838 = vshrl.u32 %v681, 16
      %v840 = vrot.slane %v838, 1
      %v841 = vshll.u32 %v681, 16
      %v843 = vrot.slane %v841, 2
      %v844 = vor.u32 %v840, %v843
      %v845 = vsel %vm801, %v835, %v844
      %v847 = vshrl.u32 %v800, 16
      %v849 = vrot.slane %v847, 1
      %v850 = vshll.u32 %v800, 16
      %v852 = vrot.slane %v850, 2
      %v853 = vor.u32 %v849, %v852
      %v854 = vsel %vm801, %v844, %v853
      %v856 = vsel %vm344, %v818, 0
      %v859 = vsel %vm344, %v827, 0
      %v862 = vsel %vm344, %v836, 0
      %v865 = vsel %vm344, %v845, 0
      %v868 = vsel %vm344, %v854, 0
      %v871 = vsel %vm360, %v797, 0
      %873 = vmatprep.subr.bf16.mxu0 0
      %874 = vmatpush1.bf16.msra.mxu0 %v871
      %875 = vmatprep.subr.bf16.mxu0 0
      %876 = vmatpush1.bf16.msra.mxu0 0
      %877 = vmatprep.subr.bf16.mxu0 0
      %878 = vmatpush1.bf16.msra.mxu0 0
      %879 = vmatprep.subr.bf16.mxu0 0
      %880 = vmatpush1.bf16.msra.mxu0 0
      %881 = vmatprep.subr.bf16.mxu0 0
      %882 = vmatpush1.bf16.msra.mxu0 0
      %883 = vmatprep.subr.bf16.mxu0 0
      %884 = vmatpush1.bf16.msra.mxu0 0
      %885 = vmatprep.subr.bf16.mxu0 0
      %886 = vmatpush1.bf16.msra.mxu0 0
      %887 = vmatprep.subr.bf16.mxu0 0
      %888 = vmatpush1.bf16.msra.mxu0 0
      %889 = vmatprep.subr.bf16.mxu0 0
      %890 = vmatpush1.bf16.msra.mxu0 0
      %891 = vmatprep.subr.bf16.mxu0 0
      %892 = vmatpush1.bf16.msra.mxu0 0
      %893 = vmatprep.subr.bf16.mxu0 0
      %894 = vmatpush1.bf16.msra.mxu0 0
      %895 = vmatprep.subr.bf16.mxu0 0
      %896 = vmatpush1.bf16.msra.mxu0 0
      %897 = vmatprep.subr.bf16.mxu0 0
      %898 = vmatpush1.bf16.msra.mxu0 0
      %899 = vmatprep.subr.bf16.mxu0 0
      %900 = vmatpush1.bf16.msra.mxu0 0
      %901 = vmatprep.subr.bf16.mxu0 0
      %902 = vmatpush1.bf16.msra.mxu0 0
      %903 = vmatprep.subr.bf16.mxu0 0
      %904 = vmatpush1.bf16.msra.mxu0 0
      %905 = vmatprep.mubr.bf16.mxu0 0
      %906 = vmatmul.mubr.bf16.gmra.mrb[0].mxu0 %v856
      %v907 = vpop.f32.mrb[0].mxu0
      %v908 = vadd.f32 0.0, %v907
      %v909 = vpop.f32.mrb[0].mxu0
      %v910 = vpop.f32.mrb[0].mxu0
      %v911 = vadd.f32 0.0, %v910
      %v912 = vpop.f32.mrb[0].mxu0
      %913 = vmatprep.mubr.bf16.mxu0 0
      %914 = vmatmul.mubr.bf16.gmra.mrb[0].mxu0 %v859
      %v915 = vpop.f32.mrb[0].mxu0
      %v916 = vadd.f32 0.0, %v915
      %v917 = vpop.f32.mrb[0].mxu0
      %v918 = vpop.f32.mrb[0].mxu0
      %v919 = vadd.f32 0.0, %v918
      %v920 = vpop.f32.mrb[0].mxu0
      %921 = vmatprep.mubr.bf16.mxu0 0
      %922 = vmatmul.mubr.bf16.gmra.mrb[0].mxu0 %v862
      %v923 = vpop.f32.mrb[0].mxu0
      %v924 = vadd.f32 0.0, %v923
      %v925 = vpop.f32.mrb[0].mxu0
      %v926 = vpop.f32.mrb[0].mxu0
      %v927 = vadd.f32 0.0, %v926
      %v928 = vpop.f32.mrb[0].mxu0
      %929 = vmatprep.mubr.bf16.mxu0 0
      %930 = vmatmul.mubr.bf16.gmra.mrb[0].mxu0 %v865
      %v931 = vpop.f32.mrb[0].mxu0
      %v932 = vadd.f32 0.0, %v931
      %v933 = vpop.f32.mrb[0].mxu0
      %v934 = vpop.f32.mrb[0].mxu0
      %v935 = vadd.f32 0.0, %v934
      %v936 = vpop.f32.mrb[0].mxu0
      %937 = vmatprep.mubr.bf16.mxu0 0
      %938 = vmatmul.mubr.bf16.gmra.mrb[0].mxu0 %v868
      %v939 = vpop.f32.mrb[0].mxu0
      %v940 = vadd.f32 0.0, %v939
      %v941 = vpop.f32.mrb[0].mxu0
      %v942 = vpop.f32.mrb[0].mxu0
      %v943 = vadd.f32 0.0, %v942
      %v944 = vpop.f32.mrb[0].mxu0
      %945 = vdwg.mxu0
      %v946 = vadd.f32 %v785, %v908
      %v947 = vadd.f32 %v786, %v911
      %v948 = vadd.f32 %v787, %v916
      %v949 = vadd.f32 %v788, %v919
      %v950 = vadd.f32 %v789, %v924
      %v951 = vadd.f32 %v790, %v927
      %v952 = vadd.f32 %v791, %v932
      %v953 = vadd.f32 %v792, %v935
      %v954 = vadd.f32 %v793, %v940
      %v955 = vadd.f32 %v794, %v943
      %v956 = vld [vmem:[%s234 + $0x4] sm:$0xc]
      %s957 = scalar_lea.vmem %s1, 20
      %v958 = vld [vmem:[%s957] sm:$0xf]
      %v960 = vunpack.c.l.b16 %v956
      %v961 = vpack.c.b16 %v667, %v960
      %vm962 = vcmask 1045504
      %v963 = vrot.slane %v961, 2
      %v964 = vrot.slane %v678, 2
      %v965 = vsel %vm962, %v963, %v964
      %v966 = vrot.slane %v679, 2
      %v967 = vsel %vm962, %v964, %v966
      %v968 = vrot.slane %v680, 2
      %v969 = vsel %vm962, %v966, %v968
      %v970 = vrot.slane %v681, 2
      %v971 = vsel %vm962, %v968, %v970
      %v972 = vrot.slane %v800, 2
      %v973 = vsel %vm962, %v970, %v972
      %v975 = vsel %vm344, %v965, 0
      %v978 = vsel %vm344, %v967, 0
      %v981 = vsel %vm344, %v969, 0
      %v984 = vsel %vm344, %v971, 0
      %v987 = vsel %vm344, %v973, 0
      %v990 = vsel %vm360, %v958, 0
      %992 = vmatprep.subr.bf16.mxu0 0
      %993 = vmatpush1.bf16.msra.mxu0 %v990
      %994 = vmatprep.subr.bf16.mxu0 0
      %995 = vmatpush1.bf16.msra.mxu0 0
      %996 = vmatprep.subr.bf16.mxu0 0
      %997 = vmatpush1.bf16.msra.mxu0 0
      %998 = vmatprep.subr.bf16.mxu0 0
      %999 = vmatpush1.bf16.msra.mxu0 0
      %1000 = vmatprep.subr.bf16.mxu0 0
      %1001 = vmatpush1.bf16.msra.mxu0 0
      %1002 = vmatprep.subr.bf16.mxu0 0
      %1003 = vmatpush1.bf16.msra.mxu0 0
      %1004 = vmatprep.subr.bf16.mxu0 0
      %1005 = vmatpush1.bf16.msra.mxu0 0
      %1006 = vmatprep.subr.bf16.mxu0 0
      %1007 = vmatpush1.bf16.msra.mxu0 0
      %1008 = vmatprep.subr.bf16.mxu0 0
      %1009 = vmatpush1.bf16.msra.mxu0 0
      %1010 = vmatprep.subr.bf16.mxu0 0
      %1011 = vmatpush1.bf16.msra.mxu0 0
      %1012 = vmatprep.subr.bf16.mxu0 0
      %1013 = vmatpush1.bf16.msra.mxu0 0
      %1014 = vmatprep.subr.bf16.mxu0 0
      %1015 = vmatpush1.bf16.msra.mxu0 0
      %1016 = vmatprep.subr.bf16.mxu0 0
      %1017 = vmatpush1.bf16.msra.mxu0 0
      %1018 = vmatprep.subr.bf16.mxu0 0
      %1019 = vmatpush1.bf16.msra.mxu0 0
      %1020 = vmatprep.subr.bf16.mxu0 0
      %1021 = vmatpush1.bf16.msra.mxu0 0
      %1022 = vmatprep.subr.bf16.mxu0 0
      %1023 = vmatpush1.bf16.msra.mxu0 0
      %1024 = vmatprep.mubr.bf16.mxu0 0
      %1025 = vmatmul.mubr.bf16.gmra.mrb[0].mxu0 %v975
      %v1026 = vpop.f32.mrb[0].mxu0
      %v1027 = vadd.f32 0.0, %v1026
      %v1028 = vpop.f32.mrb[0].mxu0
      %v1029 = vpop.f32.mrb[0].mxu0
      %v1030 = vadd.f32 0.0, %v1029
      %v1031 = vpop.f32.mrb[0].mxu0
      %1032 = vmatprep.mubr.bf16.mxu0 0
      %1033 = vmatmul.mubr.bf16.gmra.mrb[0].mxu0 %v978
      %v1034 = vpop.f32.mrb[0].mxu0
      %v1035 = vadd.f32 0.0, %v1034
      %v1036 = vpop.f32.mrb[0].mxu0
      %v1037 = vpop.f32.mrb[0].mxu0
      %v1038 = vadd.f32 0.0, %v1037
      %v1039 = vpop.f32.mrb[0].mxu0
      %1040 = vmatprep.mubr.bf16.mxu0 0
      %1041 = vmatmul.mubr.bf16.gmra.mrb[0].mxu0 %v981
      %v1042 = vpop.f32.mrb[0].mxu0
      %v1043 = vadd.f32 0.0, %v1042
      %v1044 = vpop.f32.mrb[0].mxu0
      %v1045 = vpop.f32.mrb[0].mxu0
      %v1046 = vadd.f32 0.0, %v1045
      %v1047 = vpop.f32.mrb[0].mxu0
      %1048 = vmatprep.mubr.bf16.mxu0 0
      %1049 = vmatmul.mubr.bf16.gmra.mrb[0].mxu0 %v984
      %v1050 = vpop.f32.mrb[0].mxu0
      %v1051 = vadd.f32 0.0, %v1050
      %v1052 = vpop.f32.mrb[0].mxu0
      %v1053 = vpop.f32.mrb[0].mxu0
      %v1054 = vadd.f32 0.0, %v1053
      %v1055 = vpop.f32.mrb[0].mxu0
      %1056 = vmatprep.mubr.bf16.mxu0 0
      %1057 = vmatmul.mubr.bf16.gmra.mrb[0].mxu0 %v987
      %v1058 = vpop.f32.mrb[0].mxu0
      %v1059 = vadd.f32 0.0, %v1058
      %v1060 = vpop.f32.mrb[0].mxu0
      %v1061 = vpop.f32.mrb[0].mxu0
      %v1062 = vadd.f32 0.0, %v1061
      %v1063 = vpop.f32.mrb[0].mxu0
      %1064 = vdwg.mxu0
      %v1065 = vadd.f32 %v946, %v1027
      %v1066 = vadd.f32 %v947, %v1030
      %v1067 = vadd.f32 %v948, %v1035
      %v1068 = vadd.f32 %v949, %v1038
      %v1069 = vadd.f32 %v950, %v1043
      %v1070 = vadd.f32 %v951, %v1046
      %v1071 = vadd.f32 %v952, %v1051
      %v1072 = vadd.f32 %v953, %v1054
      %v1073 = vadd.f32 %v954, %v1059
      %v1074 = vadd.f32 %v955, %v1062
      %v1075 = vld [vmem:[%s234 + $0x8] sm:$0xc]
      %v1076 = vld [vmem:[%s234 + $0xc] sm:$0xf]
      %v1077 = vld [vmem:[%s234 + $0x10] sm:$0xf]
      %v1078 = vld [vmem:[%s234 + $0x14] sm:$0xf]
      %v1079 = vld [vmem:[%s234 + $0x18] sm:$0xf]
      %v1080 = vld [vmem:[%s234 + $0x1c] sm:$0xf]
      %v1081 = vld [vmem:[%s234 + $0x20] sm:$0xf]
      %v1082 = vld [vmem:[%s234 + $0x24] sm:$0xf]
      %v1083 = vld [vmem:[%s234 + $0x28] sm:$0xf]
      %v1084 = vld [vmem:[%s234 + $0x2c] sm:$0xf]
      %v1085 = vld [vmem:[%s234 + $0x30] sm:$0x3]
      %s1086 = scalar_lea.vmem %s1, 24
      %v1087 = vld [vmem:[%s1086] sm:$0xf]
      %v1099 = vunpack.c.l.b16 %v1075
      %v1100 = vunpack.c.l.b16 %v1076
      %v1101 = vunpack.c.l.b16 %v1077
      %v1102 = vunpack.c.l.b16 %v1078
      %v1103 = vunpack.c.l.b16 %v1079
      %v1104 = vunpack.c.l.b16 %v1080
      %v1105 = vunpack.c.l.b16 %v1081
      %v1106 = vunpack.c.l.b16 %v1082
      %v1107 = vunpack.c.l.b16 %v1083
      %v1108 = vunpack.c.l.b16 %v1084
      %v1109 = vunpack.c.l.b16 %v1085
      %v1110 = vpack.c.b16 %v1100, %v1099
      %v1111 = vpack.c.b16 %v1102, %v1101
      %v1112 = vpack.c.b16 %v1104, %v1103
      %v1113 = vpack.c.b16 %v1106, %v1105
      %v1114 = vpack.c.b16 %v1108, %v1107
      %v1115 = vpack.c.b16 %v1109, %v1109
      %v1116 = vrot.slane %v1110, 2
      %v1117 = vrot.slane %v1111, 2
      %v1118 = vsel %vm962, %v1116, %v1117
      %v1119 = vrot.slane %v1112, 2
      %v1120 = vsel %vm962, %v1117, %v1119
      %v1121 = vrot.slane %v1113, 2
      %v1122 = vsel %vm962, %v1119, %v1121
      %v1123 = vrot.slane %v1114, 2
      %v1124 = vsel %vm962, %v1121, %v1123
      %v1125 = vrot.slane %v1115, 2
      %v1126 = vsel %vm962, %v1123, %v1125
      %v1128 = vsel %vm344, %v1118, 0
      %v1131 = vsel %vm344, %v1120, 0
      %v1134 = vsel %vm344, %v1122, 0
      %v1137 = vsel %vm344, %v1124, 0
      %v1140 = vsel %vm344, %v1126, 0
      %v1143 = vsel %vm360, %v1087, 0
      %1145 = vmatprep.subr.bf16.mxu0 0
      %1146 = vmatpush1.bf16.msra.mxu0 %v1143
      %1147 = vmatprep.subr.bf16.mxu0 0
      %1148 = vmatpush1.bf16.msra.mxu0 0
      %1149 = vmatprep.subr.bf16.mxu0 0
      %1150 = vmatpush1.bf16.msra.mxu0 0
      %1151 = vmatprep.subr.bf16.mxu0 0
      %1152 = vmatpush1.bf16.msra.mxu0 0
      %1153 = vmatprep.subr.bf16.mxu0 0
      %1154 = vmatpush1.bf16.msra.mxu0 0
      %1155 = vmatprep.subr.bf16.mxu0 0
      %1156 = vmatpush1.bf16.msra.mxu0 0
      %1157 = vmatprep.subr.bf16.mxu0 0
      %1158 = vmatpush1.bf16.msra.mxu0 0
      %1159 = vmatprep.subr.bf16.mxu0 0
      %1160 = vmatpush1.bf16.msra.mxu0 0
      %1161 = vmatprep.subr.bf16.mxu0 0
      %1162 = vmatpush1.bf16.msra.mxu0 0
      %1163 = vmatprep.subr.bf16.mxu0 0
      %1164 = vmatpush1.bf16.msra.mxu0 0
      %1165 = vmatprep.subr.bf16.mxu0 0
      %1166 = vmatpush1.bf16.msra.mxu0 0
      %1167 = vmatprep.subr.bf16.mxu0 0
      %1168 = vmatpush1.bf16.msra.mxu0 0
      %1169 = vmatprep.subr.bf16.mxu0 0
      %1170 = vmatpush1.bf16.msra.mxu0 0
      %1171 = vmatprep.subr.bf16.mxu0 0
      %1172 = vmatpush1.bf16.msra.mxu0 0
      %1173 = vmatprep.subr.bf16.mxu0 0
      %1174 = vmatpush1.bf16.msra.mxu0 0
      %1175 = vmatprep.subr.bf16.mxu0 0
      %1176 = vmatpush1.bf16.msra.mxu0 0
      %1177 = vmatprep.mubr.bf16.mxu0 0
      %1178 = vmatmul.mubr.bf16.gmra.mrb[0].mxu0 %v1128
      %v1179 = vpop.f32.mrb[0].mxu0
      %v1180 = vadd.f32 0.0, %v1179
      %v1181 = vpop.f32.mrb[0].mxu0
      %v1182 = vpop.f32.mrb[0].mxu0
      %v1183 = vadd.f32 0.0, %v1182
      %v1184 = vpop.f32.mrb[0].mxu0
      %1185 = vmatprep.mubr.bf16.mxu0 0
      %1186 = vmatmul.mubr.bf16.gmra.mrb[0].mxu0 %v1131
      %v1187 = vpop.f32.mrb[0].mxu0
      %v1188 = vadd.f32 0.0, %v1187
      %v1189 = vpop.f32.mrb[0].mxu0
      %v1190 = vpop.f32.mrb[0].mxu0
      %v1191 = vadd.f32 0.0, %v1190
      %v1192 = vpop.f32.mrb[0].mxu0
      %1193 = vmatprep.mubr.bf16.mxu0 0
      %1194 = vmatmul.mubr.bf16.gmra.mrb[0].mxu0 %v1134
      %v1195 = vpop.f32.mrb[0].mxu0
      %v1196 = vadd.f32 0.0, %v1195
      %v1197 = vpop.f32.mrb[0].mxu0
      %v1198 = vpop.f32.mrb[0].mxu0
      %v1199 = vadd.f32 0.0, %v1198
      %v1200 = vpop.f32.mrb[0].mxu0
      %1201 = vmatprep.mubr.bf16.mxu0 0
      %1202 = vmatmul.mubr.bf16.gmra.mrb[0].mxu0 %v1137
      %v1203 = vpop.f32.mrb[0].mxu0
      %v1204 = vadd.f32 0.0, %v1203
      %v1205 = vpop.f32.mrb[0].mxu0
      %v1206 = vpop.f32.mrb[0].mxu0
      %v1207 = vadd.f32 0.0, %v1206
      %v1208 = vpop.f32.mrb[0].mxu0
      %1209 = vmatprep.mubr.bf16.mxu0 0
      %1210 = vmatmul.mubr.bf16.gmra.mrb[0].mxu0 %v1140
      %v1211 = vpop.f32.mrb[0].mxu0
      %v1212 = vadd.f32 0.0, %v1211
      %v1213 = vpop.f32.mrb[0].mxu0
      %v1214 = vpop.f32.mrb[0].mxu0
      %v1215 = vadd.f32 0.0, %v1214
      %v1216 = vpop.f32.mrb[0].mxu0
      %1217 = vdwg.mxu0
      %v1218 = vadd.f32 %v1065, %v1180
      %v1219 = vadd.f32 %v1066, %v1183
      %v1220 = vadd.f32 %v1067, %v1188
      %v1221 = vadd.f32 %v1068, %v1191
      %v1222 = vadd.f32 %v1069, %v1196
      %v1223 = vadd.f32 %v1070, %v1199
      %v1224 = vadd.f32 %v1071, %v1204
      %v1225 = vadd.f32 %v1072, %v1207
      %v1226 = vadd.f32 %v1073, %v1212
      %v1227 = vadd.f32 %v1074, %v1215
      %v1228 = vld [vmem:[%s234 + $0x30] sm:$0x7]
      %s1229 = scalar_lea.vmem %s1, 28
      %v1230 = vld [vmem:[%s1229] sm:$0xf]
      %v1232 = vunpack.c.l.b16 %v1228
      %v1233 = vpack.c.b16 %v1232, %v1232
      %vm1234 = vsmask.f32 5376
      %v1236 = vshrl.u32 %v1110, 16
      %v1238 = vrot.slane %v1236, 2
      %v1239 = vshll.u32 %v1110, 16
      %v1241 = vrot.slane %v1239, 3
      %v1242 = vor.u32 %v1238, %v1241
      %v1244 = vshrl.u32 %v1111, 16
      %v1246 = vrot.slane %v1244, 2
      %v1247 = vshll.u32 %v1111, 16
      %v1249 = vrot.slane %v1247, 3
      %v1250 = vor.u32 %v1246, %v1249
      %v1251 = vsel %vm1234, %v1242, %v1250
      %v1253 = vshrl.u32 %v1112, 16
      %v1255 = vrot.slane %v1253, 2
      %v1256 = vshll.u32 %v1112, 16
      %v1258 = vrot.slane %v1256, 3
      %v1259 = vor.u32 %v1255, %v1258
      %v1260 = vsel %vm1234, %v1250, %v1259
      %v1262 = vshrl.u32 %v1113, 16
      %v1264 = vrot.slane %v1262, 2
      %v1265 = vshll.u32 %v1113, 16
      %v1267 = vrot.slane %v1265, 3
      %v1268 = vor.u32 %v1264, %v1267
      %v1269 = vsel %vm1234, %v1259, %v1268
      %v1271 = vshrl.u32 %v1114, 16
      %v1273 = vrot.slane %v1271, 2
      %v1274 = vshll.u32 %v1114, 16
      %v1276 = vrot.slane %v1274, 3
      %v1277 = vor.u32 %v1273, %v1276
      %v1278 = vsel %vm1234, %v1268, %v1277
      %v1280 = vshrl.u32 %v1233, 16
      %v1282 = vrot.slane %v1280, 2
      %v1283 = vshll.u32 %v1233, 16
      %v1285 = vrot.slane %v1283, 3
      %v1286 = vor.u32 %v1282, %v1285
      %v1287 = vsel %vm1234, %v1277, %v1286
      %v1289 = vsel %vm344, %v1251, 0
      %v1292 = vsel %vm344, %v1260, 0
      %v1295 = vsel %vm344, %v1269, 0
      %v1298 = vsel %vm344, %v1278, 0
      %v1301 = vsel %vm344, %v1287, 0
      %v1304 = vsel %vm360, %v1230, 0
      %1306 = vmatprep.subr.bf16.mxu0 0
      %1307 = vmatpush1.bf16.msra.mxu0 %v1304
      %1308 = vmatprep.subr.bf16.mxu0 0
      %1309 = vmatpush1.bf16.msra.mxu0 0
      %1310 = vmatprep.subr.bf16.mxu0 0
      %1311 = vmatpush1.bf16.msra.mxu0 0
      %1312 = vmatprep.subr.bf16.mxu0 0
      %1313 = vmatpush1.bf16.msra.mxu0 0
      %1314 = vmatprep.subr.bf16.mxu0 0
      %1315 = vmatpush1.bf16.msra.mxu0 0
      %1316 = vmatprep.subr.bf16.mxu0 0
      %1317 = vmatpush1.bf16.msra.mxu0 0
      %1318 = vmatprep.subr.bf16.mxu0 0
      %1319 = vmatpush1.bf16.msra.mxu0 0
      %1320 = vmatprep.subr.bf16.mxu0 0
      %1321 = vmatpush1.bf16.msra.mxu0 0
      %1322 = vmatprep.subr.bf16.mxu0 0
      %1323 = vmatpush1.bf16.msra.mxu0 0
      %1324 = vmatprep.subr.bf16.mxu0 0
      %1325 = vmatpush1.bf16.msra.mxu0 0
      %1326 = vmatprep.subr.bf16.mxu0 0
      %1327 = vmatpush1.bf16.msra.mxu0 0
      %1328 = vmatprep.subr.bf16.mxu0 0
      %1329 = vmatpush1.bf16.msra.mxu0 0
      %1330 = vmatprep.subr.bf16.mxu0 0
      %1331 = vmatpush1.bf16.msra.mxu0 0
      %1332 = vmatprep.subr.bf16.mxu0 0
      %1333 = vmatpush1.bf16.msra.mxu0 0
      %1334 = vmatprep.subr.bf16.mxu0 0
      %1335 = vmatpush1.bf16.msra.mxu0 0
      %1336 = vmatprep.subr.bf16.mxu0 0
      %1337 = vmatpush1.bf16.msra.mxu0 0
      %1338 = vmatprep.mubr.bf16.mxu0 0
      %1339 = vmatmul.mubr.bf16.gmra.mrb[0].mxu0 %v1289
      %v1340 = vpop.f32.mrb[0].mxu0
      %v1341 = vadd.f32 0.0, %v1340
      %v1342 = vpop.f32.mrb[0].mxu0
      %v1343 = vpop.f32.mrb[0].mxu0
      %v1344 = vadd.f32 0.0, %v1343
      %v1345 = vpop.f32.mrb[0].mxu0
      %1346 = vmatprep.mubr.bf16.mxu0 0
      %1347 = vmatmul.mubr.bf16.gmra.mrb[0].mxu0 %v1292
      %v1348 = vpop.f32.mrb[0].mxu0
      %v1349 = vadd.f32 0.0, %v1348
      %v1350 = vpop.f32.mrb[0].mxu0
      %v1351 = vpop.f32.mrb[0].mxu0
      %v1352 = vadd.f32 0.0, %v1351
      %v1353 = vpop.f32.mrb[0].mxu0
      %1354 = vmatprep.mubr.bf16.mxu0 0
      %1355 = vmatmul.mubr.bf16.gmra.mrb[0].mxu0 %v1295
      %v1356 = vpop.f32.mrb[0].mxu0
      %v1357 = vadd.f32 0.0, %v1356
      %v1358 = vpop.f32.mrb[0].mxu0
      %v1359 = vpop.f32.mrb[0].mxu0
      %v1360 = vadd.f32 0.0, %v1359
      %v1361 = vpop.f32.mrb[0].mxu0
      %1362 = vmatprep.mubr.bf16.mxu0 0
      %1363 = vmatmul.mubr.bf16.gmra.mrb[0].mxu0 %v1298
      %v1364 = vpop.f32.mrb[0].mxu0
      %v1365 = vadd.f32 0.0, %v1364
      %v1366 = vpop.f32.mrb[0].mxu0
      %v1367 = vpop.f32.mrb[0].mxu0
      %v1368 = vadd.f32 0.0, %v1367
      %v1369 = vpop.f32.mrb[0].mxu0
      %1370 = vmatprep.mubr.bf16.mxu0 0
      %1371 = vmatmul.mubr.bf16.gmra.mrb[0].mxu0 %v1301
      %v1372 = vpop.f32.mrb[0].mxu0
      %v1373 = vadd.f32 0.0, %v1372
      %v1374 = vpop.f32.mrb[0].mxu0
      %v1375 = vpop.f32.mrb[0].mxu0
      %v1376 = vadd.f32 0.0, %v1375
      %v1377 = vpop.f32.mrb[0].mxu0
      %1378 = vdwg.mxu0
      %v1379 = vadd.f32 %v1218, %v1341
      %v1380 = vadd.f32 %v1219, %v1344
      %v1381 = vadd.f32 %v1220, %v1349
      %v1382 = vadd.f32 %v1221, %v1352
      %v1383 = vadd.f32 %v1222, %v1357
      %v1384 = vadd.f32 %v1223, %v1360
      %v1385 = vadd.f32 %v1224, %v1365
      %v1386 = vadd.f32 %v1225, %v1368
      %v1387 = vadd.f32 %v1226, %v1373
      %v1388 = vadd.f32 %v1227, %v1376
      %v1389 = vld [vmem:[%s234 + $0x8] sm:$0x8]
      %s1390 = scalar_lea.vmem %s1, 32
      %v1391 = vld [vmem:[%s1390] sm:$0xf]
      %v1393 = vunpack.c.l.b16 %v1389
      %v1394 = vpack.c.b16 %v1100, %v1393
      %vm1395 = vcmask 1044480
      %v1396 = vrot.slane %v1394, 3
      %v1397 = vrot.slane %v1111, 3
      %v1398 = vsel %vm1395, %v1396, %v1397
      %v1399 = vrot.slane %v1112, 3
      %v1400 = vsel %vm1395, %v1397, %v1399
      %v1401 = vrot.slane %v1113, 3
      %v1402 = vsel %vm1395, %v1399, %v1401
      %v1403 = vrot.slane %v1114, 3
      %v1404 = vsel %vm1395, %v1401, %v1403
      %v1405 = vrot.slane %v1233, 3
      %v1406 = vsel %vm1395, %v1403, %v1405
      %v1408 = vsel %vm344, %v1398, 0
      %v1411 = vsel %vm344, %v1400, 0
      %v1414 = vsel %vm344, %v1402, 0
      %v1417 = vsel %vm344, %v1404, 0
      %v1420 = vsel %vm344, %v1406, 0
      %v1423 = vsel %vm360, %v1391, 0
      %1425 = vmatprep.subr.bf16.mxu0 0
      %1426 = vmatpush1.bf16.msra.mxu0 %v1423
      %1427 = vmatprep.subr.bf16.mxu0 0
      %1428 = vmatpush1.bf16.msra.mxu0 0
      %1429 = vmatprep.subr.bf16.mxu0 0
      %1430 = vmatpush1.bf16.msra.mxu0 0
      %1431 = vmatprep.subr.bf16.mxu0 0
      %1432 = vmatpush1.bf16.msra.mxu0 0
      %1433 = vmatprep.subr.bf16.mxu0 0
      %1434 = vmatpush1.bf16.msra.mxu0 0
      %1435 = vmatprep.subr.bf16.mxu0 0
      %1436 = vmatpush1.bf16.msra.mxu0 0
      %1437 = vmatprep.subr.bf16.mxu0 0
      %1438 = vmatpush1.bf16.msra.mxu0 0
      %1439 = vmatprep.subr.bf16.mxu0 0
      %1440 = vmatpush1.bf16.msra.mxu0 0
      %1441 = vmatprep.subr.bf16.mxu0 0
      %1442 = vmatpush1.bf16.msra.mxu0 0
      %1443 = vmatprep.subr.bf16.mxu0 0
      %1444 = vmatpush1.bf16.msra.mxu0 0
      %1445 = vmatprep.subr.bf16.mxu0 0
      %1446 = vmatpush1.bf16.msra.mxu0 0
      %1447 = vmatprep.subr.bf16.mxu0 0
      %1448 = vmatpush1.bf16.msra.mxu0 0
      %1449 = vmatprep.subr.bf16.mxu0 0
      %1450 = vmatpush1.bf16.msra.mxu0 0
      %1451 = vmatprep.subr.bf16.mxu0 0
      %1452 = vmatpush1.bf16.msra.mxu0 0
      %1453 = vmatprep.subr.bf16.mxu0 0
      %1454 = vmatpush1.bf16.msra.mxu0 0
      %1455 = vmatprep.subr.bf16.mxu0 0
      %1456 = vmatpush1.bf16.msra.mxu0 0
      %1457 = vmatprep.mubr.bf16.mxu0 0
      %1458 = vmatmul.mubr.bf16.gmra.mrb[0].mxu0 %v1408
      %v1459 = vpop.f32.mrb[0].mxu0
      %v1460 = vadd.f32 0.0, %v1459
      %v1461 = vpop.f32.mrb[0].mxu0
      %v1462 = vpop.f32.mrb[0].mxu0
      %v1463 = vadd.f32 0.0, %v1462
      %v1464 = vpop.f32.mrb[0].mxu0
      %1465 = vmatprep.mubr.bf16.mxu0 0
      %1466 = vmatmul.mubr.bf16.gmra.mrb[0].mxu0 %v1411
      %v1467 = vpop.f32.mrb[0].mxu0
      %v1468 = vadd.f32 0.0, %v1467
      %v1469 = vpop.f32.mrb[0].mxu0
      %v1470 = vpop.f32.mrb[0].mxu0
      %v1471 = vadd.f32 0.0, %v1470
      %v1472 = vpop.f32.mrb[0].mxu0
      %1473 = vmatprep.mubr.bf16.mxu0 0
      %1474 = vmatmul.mubr.bf16.gmra.mrb[0].mxu0 %v1414
      %v1475 = vpop.f32.mrb[0].mxu0
      %v1476 = vadd.f32 0.0, %v1475
      %v1477 = vpop.f32.mrb[0].mxu0
      %v1478 = vpop.f32.mrb[0].mxu0
      %v1479 = vadd.f32 0.0, %v1478
      %v1480 = vpop.f32.mrb[0].mxu0
      %1481 = vmatprep.mubr.bf16.mxu0 0
      %1482 = vmatmul.mubr.bf16.gmra.mrb[0].mxu0 %v1417
      %v1483 = vpop.f32.mrb[0].mxu0
      %v1484 = vadd.f32 0.0, %v1483
      %v1485 = vpop.f32.mrb[0].mxu0
      %v1486 = vpop.f32.mrb[0].mxu0
      %v1487 = vadd.f32 0.0, %v1486
      %v1488 = vpop.f32.mrb[0].mxu0
      %1489 = vmatprep.mubr.bf16.mxu0 0
      %1490 = vmatmul.mubr.bf16.gmra.mrb[0].mxu0 %v1420
      %v1491 = vpop.f32.mrb[0].mxu0
      %v1492 = vadd.f32 0.0, %v1491
      %v1493 = vpop.f32.mrb[0].mxu0
      %v1494 = vpop.f32.mrb[0].mxu0
      %v1495 = vadd.f32 0.0, %v1494
      %v1496 = vpop.f32.mrb[0].mxu0
      %1497 = vdwg.mxu0
      %v1498 = vadd.f32 %v1379, %v1460
      %v1499 = vadd.f32 %v1380, %v1463
      %v1500 = vadd.f32 %v1381, %v1468
      %v1501 = vadd.f32 %v1382, %v1471
      %v1502 = vadd.f32 %v1383, %v1476
      %v1503 = vadd.f32 %v1384, %v1479
      %v1504 = vadd.f32 %v1385, %v1484
      %v1505 = vadd.f32 %v1386, %v1487
      %v1506 = vadd.f32 %v1387, %v1492
      %v1507 = vadd.f32 %v1388, %v1495
      %v1518 = vunpack.c.l.b16 %v246
      %v1519 = vunpack.c.l.b16 %v247
      %v1520 = vunpack.c.l.b16 %v248
      %v1521 = vunpack.c.l.b16 %v249
      %v1522 = vunpack.c.l.b16 %v250
      %v1523 = vunpack.c.l.b16 %v251
      %v1524 = vunpack.c.l.b16 %v252
      %v1525 = vunpack.c.l.b16 %v253
      %v1526 = vunpack.c.l.b16 %v254
      %v1527 = vunpack.c.l.b16 %v255
      %v1528 = vpack.c.b16 %v1519, %v1518
      %v1529 = vpack.c.b16 %v1521, %v1520
      %v1530 = vpack.c.b16 %v1523, %v1522
      %v1531 = vpack.c.b16 %v1525, %v1524
      %v1532 = vpack.c.b16 %v1527, %v1526
      %vm1533 = vcmask 31744
      %v1535 = vsel %vm1533, %v1528, 0
      %v1538 = vsel %vm1533, %v1529, 0
      %v1541 = vsel %vm1533, %v1530, 0
      %v1544 = vsel %vm1533, %v1531, 0
      %v1547 = vsel %vm1533, %v1532, 0
      %vm1549 = vcmask 1041408
      %v1551 = vsel %vm1549, %v256, 0
      %1553 = vmatprep.subr.bf16.mxu0 0
      %1554 = vmatpush1.bf16.msra.mxu0 %v1551
      %1555 = vmatprep.subr.bf16.mxu0 0
      %1556 = vmatpush1.bf16.msra.mxu0 0
      %1557 = vmatprep.subr.bf16.mxu0 0
      %1558 = vmatpush1.bf16.msra.mxu0 0
      %1559 = vmatprep.subr.bf16.mxu0 0
      %1560 = vmatpush1.bf16.msra.mxu0 0
      %1561 = vmatprep.subr.bf16.mxu0 0
      %1562 = vmatpush1.bf16.msra.mxu0 0
      %1563 = vmatprep.subr.bf16.mxu0 0
      %1564 = vmatpush1.bf16.msra.mxu0 0
      %1565 = vmatprep.subr.bf16.mxu0 0
      %1566 = vmatpush1.bf16.msra.mxu0 0
      %1567 = vmatprep.subr.bf16.mxu0 0
      %1568 = vmatpush1.bf16.msra.mxu0 0
      %1569 = vmatprep.subr.bf16.mxu0 0
      %1570 = vmatpush1.bf16.msra.mxu0 0
      %1571 = vmatprep.subr.bf16.mxu0 0
      %1572 = vmatpush1.bf16.msra.mxu0 0
      %1573 = vmatprep.subr.bf16.mxu0 0
      %1574 = vmatpush1.bf16.msra.mxu0 0
      %1575 = vmatprep.subr.bf16.mxu0 0
      %1576 = vmatpush1.bf16.msra.mxu0 0
      %1577 = vmatprep.subr.bf16.mxu0 0
      %1578 = vmatpush1.bf16.msra.mxu0 0
      %1579 = vmatprep.subr.bf16.mxu0 0
      %1580 = vmatpush1.bf16.msra.mxu0 0
      %1581 = vmatprep.subr.bf16.mxu0 0
      %1582 = vmatpush1.bf16.msra.mxu0 0
      %1583 = vmatprep.subr.bf16.mxu0 0
      %1584 = vmatpush1.bf16.msra.mxu0 0
      %1585 = vmatprep.mubr.bf16.mxu0 0
      %1586 = vmatmul.mubr.bf16.gmra.mrb[0].mxu0 %v1535
      %v1587 = vpop.f32.mrb[0].mxu0
      %v1588 = vadd.f32 %v1498, %v1587
      %v1589 = vpop.f32.mrb[0].mxu0
      %v1590 = vpop.f32.mrb[0].mxu0
      %v1591 = vadd.f32 %v1499, %v1590
      %v1592 = vpop.f32.mrb[0].mxu0
      %1593 = vmatprep.mubr.bf16.mxu0 0
      %1594 = vmatmul.mubr.bf16.gmra.mrb[0].mxu0 %v1538
      %v1595 = vpop.f32.mrb[0].mxu0
      %v1596 = vadd.f32 %v1500, %v1595
      %v1597 = vpop.f32.mrb[0].mxu0
      %v1598 = vpop.f32.mrb[0].mxu0
      %v1599 = vadd.f32 %v1501, %v1598
      %v1600 = vpop.f32.mrb[0].mxu0
      %1601 = vmatprep.mubr.bf16.mxu0 0
      %1602 = vmatmul.mubr.bf16.gmra.mrb[0].mxu0 %v1541
      %v1603 = vpop.f32.mrb[0].mxu0
      %v1604 = vadd.f32 %v1502, %v1603
      %v1605 = vpop.f32.mrb[0].mxu0
      %v1606 = vpop.f32.mrb[0].mxu0
      %v1607 = vadd.f32 %v1503, %v1606
      %v1608 = vpop.f32.mrb[0].mxu0
      %1609 = vmatprep.mubr.bf16.mxu0 0
      %1610 = vmatmul.mubr.bf16.gmra.mrb[0].mxu0 %v1544
      %v1611 = vpop.f32.mrb[0].mxu0
      %v1612 = vadd.f32 %v1504, %v1611
      %v1613 = vpop.f32.mrb[0].mxu0
      %v1614 = vpop.f32.mrb[0].mxu0
      %v1615 = vadd.f32 %v1505, %v1614
      %v1616 = vpop.f32.mrb[0].mxu0
      %1617 = vmatprep.mubr.bf16.mxu0 0
      %1618 = vmatmul.mubr.bf16.gmra.mrb[0].mxu0 %v1547
      %v1619 = vpop.f32.mrb[0].mxu0
      %v1620 = vadd.f32 %v1506, %v1619
      %v1621 = vpop.f32.mrb[0].mxu0
      %v1622 = vpop.f32.mrb[0].mxu0
      %v1623 = vadd.f32 %v1507, %v1622
      %v1624 = vpop.f32.mrb[0].mxu0
      %1625 = vdwg.mxu0
      %v1626 = vld [vmem:[%s2] sm:$0x1]
      %v1628 = vlaneseq
      %v1629 = vshrl.u32 %v1628, 7
      %v1630 = vsub.s32 0, %v1629
      %v1631 = vrot.slane %v1626, %v1630
      %v1633 = vadd.f32 %v1588, %v1631
      %v1634 = vadd.f32 %v1591, %v1631
      %v1635 = vadd.f32 %v1596, %v1631
      %v1636 = vadd.f32 %v1599, %v1631
      %v1637 = vadd.f32 %v1604, %v1631
      %v1638 = vadd.f32 %v1607, %v1631
      %v1639 = vadd.f32 %v1612, %v1631
      %v1640 = vadd.f32 %v1615, %v1631
      %v1641 = vadd.f32 %v1620, %v1631
      %v1642 = vadd.f32 %v1623, %v1631
      %v1643 = vmax.f32 %v1633, 0.0
      %v1644 = vmax.f32 %v1634, 0.0
      %v1645 = vmax.f32 %v1635, 0.0
      %v1646 = vmax.f32 %v1636, 0.0
      %v1647 = vmax.f32 %v1637, 0.0
      %v1648 = vmax.f32 %v1638, 0.0
      %v1649 = vmax.f32 %v1639, 0.0
      %v1650 = vmax.f32 %v1640, 0.0
      %v1651 = vmax.f32 %v1641, 0.0
      %v1652 = vmax.f32 %v1642, 0.0
      %1653 = vst.msk [vmem:[%s244] sm:$0xff] %vm344, %v1643
      %1654 = vst.msk [vmem:[%s244 + $0x8] sm:$0xff] %vm344, %v1644
      %1655 = vst.msk [vmem:[%s244 + $0x10] sm:$0xff] %vm344, %v1645
      %1656 = vst.msk [vmem:[%s244 + $0x18] sm:$0xff] %vm344, %v1646
      %1657 = vst.msk [vmem:[%s244 + $0x20] sm:$0xff] %vm344, %v1647
      %1658 = vst.msk [vmem:[%s244 + $0x28] sm:$0xff] %vm344, %v1648
      %1659 = vst.msk [vmem:[%s244 + $0x30] sm:$0xff] %vm344, %v1649
      %1660 = vst.msk [vmem:[%s244 + $0x38] sm:$0xff] %vm344, %v1650
      %1661 = vst.msk [vmem:[%s244 + $0x40] sm:$0xff] %vm344, %v1651
      %1662 = vst.msk [vmem:[%s244 + $0x48] sm:$0xff] %vm344, %v1652
      %p1663 = scmp.lt.s32.totalorder %s16, 1
      %s1664 = scalar_select %p1663, %s16, 1
      %s1665 = smul.addr %s1664, 10
      %s1666 = smul.addr %s1665, 8
      %s1667 = scalar_lea.vmem %s5, %s1666
      // Predicated region
      $region41: #{a_call__.3} parent=39 // pred_check
        %p1668 = pneg %p149
      $region42: #{a_call__.3} parent=39 // pred_check_branch
        %1670 = sbr.rel (%p1668) target = $region44
      $region43: #{a_call__.3} parent=39 // pred_region
        _
      $region44: #{a_call__.3} parent=39 // pred_fallthru
        _
    $region40: #{a_call__.3} parent=5 // pred_fallthru
      _
    %p1671 = scmp.le.s32.totalorder 2, %s11
    // Predicated region
    $region45: #{a_call__.3} parent=5 // pred_check
      %p1672 = pneg %p1671
    $region46: #{a_call__.3} parent=5 // pred_check_branch
      %1674 = sbr.rel (%p1672) target = $region48
    $region47: #{a_call__.3} parent=5 // pred_region
      %s1675 = ssub.s32 %s11, 2
      // Predicated region
      $region49: #{a_call__.3} parent=47 // pred_check
        %p1676 = pneg %p155
      $region50: #{a_call__.3} parent=47 // pred_check_branch
        %1678 = sbr.rel (%p1676) target = $region52
      $region51: #{a_call__.3} parent=47 // pred_region
        %p1679 = scmp.lt.s32.totalorder %s17, 1
        %s1680 = scalar_select %p1679, %s17, 1
        %s1681 = smul.addr %s1680, 10
        %s1682 = smul.addr %s1681, 8
        %s1683 = scalar_lea.vmem %s5, %s1682
      $region52: #{a_call__.3} parent=47 // pred_fallthru
        _
    $region48: #{a_call__.3} parent=5 // pred_fallthru
      _
  $region6: #{a_call__.3} parent=0 // loop_footer
    %s15 = sadd.s32 1, %s11
  $region7: #{a_call__.3} parent=0 // loop_footer_branch
    %10 = sbr.rel target = $region3
  $region8: #{a_call__.3} parent=0 // loop_exit
    _

</llo_original>
